<compile_context>
chip_gen: v7x
topology: tpu7x:2x2x1
jax: 0.10.0
libtpu: 0.0.40
codegen_flags: <defaults>
</compile_context>

<pallas_src>
import jax
import jax.numpy as jnp
from jax import lax
from jax.experimental import pallas as pl
from jax.experimental.pallas import tpu as pltpu


_VMEM = pl.BlockSpec(memory_space=pltpu.MemorySpace.VMEM)


def _bf16(x):
    return x.astype(jnp.bfloat16)


# ----------------------------------------------------------------------------
# Fused kernel: [input proj -> recurrence] per layer, then output projection.
# ----------------------------------------------------------------------------
def _make_fused_kernel(num_layers, T, B, H, O):
    def kernel(*refs):
        # ---- inputs -------------------------------------------------------
        x_ref, h0_ref, c0_ref = refs[0], refs[1], refs[2]
        layer_refs = refs[3:3 + 3 * num_layers]          # (w_ih, w_hh, bias) per layer
        w_out_ref = refs[3 + 3 * num_layers]
        b_out_ref = refs[4 + 3 * num_layers]
        # ---- outputs ------------------------------------------------------
        y_ref = refs[5 + 3 * num_layers]                  # (T, B, O)
        hN_ref = refs[6 + 3 * num_layers]                 # (L, B, H)
        cN_ref = refs[7 + 3 * num_layers]                 # (L, B, H)
        # ---- scratch ------------------------------------------------------
        gx_buf = refs[8 + 3 * num_layers]                 # (T, B, 4H) f32
        r_buf = refs[9 + 3 * num_layers]                  # (T, B, H)  f32

        for l in range(num_layers):
            w_ih = layer_refs[3 * l][...]                 # (in_dim, 4H)
            w_hh_b = _bf16(layer_refs[3 * l + 1][...])    # (H, 4H) resident in bf16
            bias = layer_refs[3 * l + 2][...]             # (1, 4H) = b_ih + b_hh

            # Hoisted input projection: ONE (T*B, in) @ (in, 4H) MXU matmul,
            # bf16 operands, f32 accumulation.  Reads full r_buf (prev layer
            # output) before the loop below overwrites it.
            xin = x_ref[...] if l == 0 else r_buf[...]
            in_dim = xin.shape[-1]
            gx = jnp.dot(_bf16(xin.reshape(T * B, in_dim)), _bf16(w_ih),
                         preferred_element_type=jnp.float32) + bias
            gx_buf[...] = gx.reshape(T, B, 4 * H)

            # Whole-sequence recurrence: h/c carried in vregs, only h @ W_hh
            # on the serial critical path.
            # TODO(synk): for large T cap the unroll (e.g. unroll=8) and
            # switch to a time-chunked grid with BlockSpec + pl.Buffered
            # pipelining (v7x has only 64 MiB VMEM).
            def step(t, carry, _w_hh=w_hh_b):
                h_prev, c_prev = carry
                gates = gx_buf[t] + jnp.dot(_bf16(h_prev), _w_hh,
                                            preferred_element_type=jnp.float32)
                # Single EUP sigmoid pass over all 4H lanes; tanh only on the
                # trailing g-gate lanes (gate order is [i, f, o, g]).
                sig = jax.nn.sigmoid(gates)
                i_g = sig[:, 0 * H:1 * H]
                f_g = sig[:, 1 * H:2 * H]
                o_g = sig[:, 2 * H:3 * H]
                g_g = jnp.tanh(gates[:, 3 * H:4 * H])
                c_new = f_g * c_prev + i_g * g_g
                h_new = o_g * jnp.tanh(c_new)
                r_buf[t] = h_new
                return (h_new, c_new)

            h_fin, c_fin = lax.fori_loop(0, T, step,
                                         (h0_ref[l], c0_ref[l]), unroll=True)
            hN_ref[l] = h_fin
            cN_ref[l] = c_fin

        # Output projection amortized into one (T*B, H) @ (H, O) matmul.
        # TODO(synk): O=4 makes this a masked sub-128-lane store; for large
        # outputs write the slab directly in (B, O, T) layout from VMEM.
        y = jnp.dot(_bf16(r_buf[...].reshape(T * B, H)), _bf16(w_out_ref[...]),
                    preferred_element_type=jnp.float32) + b_out_ref[...]
        y_ref[...] = y.reshape(T, B, O)

    return kernel


# ----------------------------------------------------------------------------
# Wrapper
# ----------------------------------------------------------------------------
@jax.jit
def rnn_forward(x, h0, c0, params):
    """Mirrors RNN.forward: returns (outs (B, O, T), h_n (L, B, H), c_n (L, B, H))."""
    B, T, _ = x.shape
    L, _, H = h0.shape
    O = params["w_out"].shape[-1]

    x_tm = jnp.transpose(x, (1, 0, 2))                    # (T, B, I) time-major

    layer_args = []
    for (w_ih, w_hh, bias) in params["lstm"]:
        layer_args += [w_ih, w_hh, bias]
    n_in = 3 + 3 * L + 2

    # TODO(synk): on v7x, shard the (independent) batch across the 2 TensorCores
    # with a parallel grid axis / pl.core_map; at B=2 the whole problem fits one
    # core, so it is left single-core here.
    y_tm, h_n, c_n = pl.pallas_call(
        _make_fused_kernel(L, T, B, H, O),
        out_shape=[
            jax.ShapeDtypeStruct((T, B, O), jnp.float32),  # per-timestep outputs
            jax.ShapeDtypeStruct((L, B, H), jnp.float32),  # h_n
            jax.ShapeDtypeStruct((L, B, H), jnp.float32),  # c_n
        ],
        in_specs=[_VMEM] * n_in,
        out_specs=[_VMEM] * 3,
        scratch_shapes=[
            pltpu.VMEM((T, B, 4 * H), jnp.float32),        # gx buffer
            pltpu.VMEM((T, B, H), jnp.float32),            # layer output buffer
        ],
    )(x_tm, h0, c0, *layer_args, params["w_out"], params["b_out"])

    outs = jnp.transpose(y_tm, (1, 2, 0))                  # (B, O, T), tiny XLA op
    return outs, h_n, c_n


# ----------------------------------------------------------------------------
# Deterministic parameter construction (PyTorch-style U(-1/sqrt(H), 1/sqrt(H))).
# Gate column order is [i, f, o, g] (sigmoid gates first, tanh gate last).
# ----------------------------------------------------------------------------
def make_params(key, input_size, hidden_size, num_layers, output_size):
    k = 1.0 / jnp.sqrt(hidden_size)
    lstm_params = []
    for layer in range(num_layers):
        in_dim = input_size if layer == 0 else hidden_size
        key, k1, k2, k3, k4 = jax.random.split(key, 5)
        w_ih = jax.random.uniform(k1, (in_dim, 4 * hidden_size), jnp.float32, -k, k)
        w_hh = jax.random.uniform(k2, (hidden_size, 4 * hidden_size), jnp.float32, -k, k)
        b_ih = jax.random.uniform(k3, (4 * hidden_size,), jnp.float32, -k, k)
        b_hh = jax.random.uniform(k4, (4 * hidden_size,), jnp.float32, -k, k)
        lstm_params.append((w_ih, w_hh, (b_ih + b_hh)[None, :]))
    key, k5, k6 = jax.random.split(key, 3)
    w_out = jax.random.uniform(k5, (hidden_size, output_size), jnp.float32, -k, k)
    b_out = jax.random.uniform(k6, (output_size,), jnp.float32, -k, k)[None, :]
    return {"lstm": lstm_params, "w_out": w_out, "b_out": b_out}


# ----------------------------------------------------------------------------
# Pure-JAX reference.  match_mxu=True mimics the kernel's bf16-operand /
# f32-accumulation matmuls (structural check); match_mxu=False is the
# full-precision reference (numerical-accuracy check).
# ----------------------------------------------------------------------------
def rnn_forward_ref(x, h0, c0, params, match_mxu=False):
    def mm(a, b):
        if match_mxu:
            return jnp.dot(a.astype(jnp.bfloat16), b.astype(jnp.bfloat16),
                           preferred_element_type=jnp.float32)
        return jnp.dot(a, b, precision=lax.Precision.HIGHEST)

    layer_in = x                                            # (B, T, *)
    hs, cs = [], []
    for (w_ih, w_hh, bias), h0_l, c0_l in zip(params["lstm"], h0, c0):
        H = h0_l.shape[-1]

        def step(carry, x_t, w_ih=w_ih, w_hh=w_hh, bias=bias, H=H):
            h, c = carry
            gates = mm(x_t, w_ih) + mm(h, w_hh) + bias[0]
            i = jax.nn.sigmoid(gates[:, 0 * H:1 * H])
            f = jax.nn.sigmoid(gates[:, 1 * H:2 * H])
            o = jax.nn.sigmoid(gates[:, 2 * H:3 * H])
            g = jnp.tanh(gates[:, 3 * H:4 * H])
            c = f * c + i * g
            h = o * jnp.tanh(c)
            return (h, c), h

        (h_n, c_n), outs = lax.scan(step, (h0_l, c0_l),
                                    jnp.transpose(layer_in, (1, 0, 2)))
        layer_in = jnp.transpose(outs, (1, 0, 2))
        hs.append(h_n)
        cs.append(c_n)

    y = mm(layer_in, params["w_out"]) + params["b_out"][0]  # (B, T, O)
    return jnp.transpose(y, (0, 2, 1)), jnp.stack(hs), jnp.stack(cs)


# ----------------------------------------------------------------------------
if __name__ == "__main__":
    B, T = 2, 8
    INPUT_SIZE, HIDDEN_SIZE, NUM_LAYERS, OUTPUT_SIZE = 16, 32, 2, 4

    key = jax.random.PRNGKey(0)
    kp, kx, kh, kc = jax.random.split(key, 4)

    params = make_params(kp, INPUT_SIZE, HIDDEN_SIZE, NUM_LAYERS, OUTPUT_SIZE)
    x = jax.random.normal(kx, (B, T, INPUT_SIZE), jnp.float32)
    h0 = jax.random.normal(kh, (NUM_LAYERS, B, HIDDEN_SIZE), jnp.float32)
    c0 = jax.random.normal(kc, (NUM_LAYERS, B, HIDDEN_SIZE), jnp.float32)

    outs, h_n, c_n = rnn_forward(x, h0, c0, params)
    jax.block_until_ready((outs, h_n, c_n))

    assert outs.shape == (B, OUTPUT_SIZE, T)
    assert h_n.shape == (NUM_LAYERS, B, HIDDEN_SIZE)
    assert c_n.shape == (NUM_LAYERS, B, HIDDEN_SIZE)

    # Structural check vs matched-precision (bf16 MXU operand) reference.
    outs_m, h_m, c_m = rnn_forward_ref(x, h0, c0, params, match_mxu=True)
    assert jnp.allclose(outs, outs_m, atol=5e-3, rtol=5e-3)
    assert jnp.allclose(h_n, h_m, atol=5e-3, rtol=5e-3)
    assert jnp.allclose(c_n, c_m, atol=5e-3, rtol=5e-3)

    # Numerical check vs full-precision reference (bf16 MXU rounding compounds
    # over the T*L-step serial recurrence, hence the looser tolerance).
    outs_r, h_r, c_r = rnn_forward_ref(x, h0, c0, params, match_mxu=False)
    assert jnp.allclose(outs, outs_r, atol=5e-2, rtol=5e-2)
    assert jnp.allclose(h_n, h_r, atol=5e-2, rtol=5e-2)
    assert jnp.allclose(c_n, c_r, atol=5e-2, rtol=5e-2)

    print("KERNEL_OK")
</pallas_src>

<mosaic_0001>
module attributes {stable_mosaic.version = 11 : i64} {
  func.func @kernel(%arg0: memref<8x2x16xf32, #tpu.memory_space<vmem>>, %arg1: memref<2x2x32xf32, #tpu.memory_space<vmem>>, %arg2: memref<2x2x32xf32, #tpu.memory_space<vmem>>, %arg3: memref<16x128xf32, #tpu.memory_space<vmem>>, %arg4: memref<32x128xf32, #tpu.memory_space<vmem>>, %arg5: memref<1x128xf32, #tpu.memory_space<vmem>>, %arg6: memref<32x128xf32, #tpu.memory_space<vmem>>, %arg7: memref<32x128xf32, #tpu.memory_space<vmem>>, %arg8: memref<1x128xf32, #tpu.memory_space<vmem>>, %arg9: memref<32x4xf32, #tpu.memory_space<vmem>>, %arg10: memref<1x4xf32, #tpu.memory_space<vmem>>, %arg11: memref<8x2x4xf32, #tpu.memory_space<vmem>>, %arg12: memref<2x2x32xf32, #tpu.memory_space<vmem>>, %arg13: memref<2x2x32xf32, #tpu.memory_space<vmem>>, %arg14: memref<8x2x128xf32, #tpu.memory_space<vmem>>, %arg15: memref<8x2x32xf32, #tpu.memory_space<vmem>>) attributes {dimension_semantics = [], scalar_prefetch = 0 : i64, scratch_operands = 2 : i64, tpu.core_type = #tpu.core_type<tc>} {
    %c0 = arith.constant 0 : index
    %c0_0 = arith.constant 0 : index
    %0 = vector.load %arg3[%c0, %c0_0] : memref<16x128xf32, #tpu.memory_space<vmem>>, vector<16x128xf32>
    %c0_1 = arith.constant 0 : index
    %c0_2 = arith.constant 0 : index
    %1 = vector.load %arg4[%c0_1, %c0_2] : memref<32x128xf32, #tpu.memory_space<vmem>>, vector<32x128xf32>
    %2 = arith.truncf %1 : vector<32x128xf32> to vector<32x128xbf16>
    %c0_3 = arith.constant 0 : index
    %c0_4 = arith.constant 0 : index
    %3 = vector.load %arg5[%c0_3, %c0_4] : memref<1x128xf32, #tpu.memory_space<vmem>>, vector<1x128xf32>
    %c0_5 = arith.constant 0 : index
    %c0_6 = arith.constant 0 : index
    %c0_7 = arith.constant 0 : index
    %4 = vector.load %arg0[%c0_5, %c0_6, %c0_7] : memref<8x2x16xf32, #tpu.memory_space<vmem>>, vector<8x2x16xf32>
    %5 = vector.shape_cast %4 : vector<8x2x16xf32> to vector<16x16xf32>
    %6 = arith.truncf %5 : vector<16x16xf32> to vector<16x16xbf16>
    %7 = arith.truncf %0 : vector<16x128xf32> to vector<16x128xbf16>
    %cst = arith.constant dense<0.000000e+00> : vector<16x128xf32>
    %8 = tpu.matmul %6, %7, %cst {dimension_numbers = #tpu.dot_dimension_numbers<[1], [0], [0], [1], [0, 0, 1, 1], [], []>} : vector<16x16xbf16>, vector<16x128xbf16>, vector<16x128xf32> -> vector<16x128xf32>
    %9 = vector.broadcast %3 : vector<1x128xf32> to vector<16x128xf32>
    %10 = arith.addf %8, %9 : vector<16x128xf32>
    %11 = vector.shape_cast %10 : vector<16x128xf32> to vector<8x2x128xf32>
    %c0_8 = arith.constant 0 : index
    %c0_9 = arith.constant 0 : index
    %c0_10 = arith.constant 0 : index
    %12 = vector.load %arg14[%c0_8, %c0_9, %c0_10] : memref<8x2x128xf32, #tpu.memory_space<vmem>>, vector<8x2x128xf32>
    tpu.vector_store %arg14[%c0_8, %c0_9, %c0_10], %11 {strides = array<i32>} : memref<8x2x128xf32, #tpu.memory_space<vmem>>, vector<8x2x128xf32>,
    %c0_11 = arith.constant 0 : index
    %c0_12 = arith.constant 0 : index
    %c0_13 = arith.constant 0 : index
    %13 = vector.load %arg1[%c0_11, %c0_12, %c0_13] : memref<2x2x32xf32, #tpu.memory_space<vmem>>, vector<1x2x32xf32>
    %14 = vector.shape_cast %13 : vector<1x2x32xf32> to vector<2x32xf32>
    %c0_14 = arith.constant 0 : index
    %c0_15 = arith.constant 0 : index
    %c0_16 = arith.constant 0 : index
    %15 = vector.load %arg2[%c0_14, %c0_15, %c0_16] : memref<2x2x32xf32, #tpu.memory_space<vmem>>, vector<1x2x32xf32>
    %16 = vector.shape_cast %15 : vector<1x2x32xf32> to vector<2x32xf32>
    %c0_i32 = arith.constant 0 : i32
    %17 = arith.index_cast %c0_i32 : i32 to index
    %c0_17 = arith.constant 0 : index
    %c0_18 = arith.constant 0 : index
    %18 = vector.load %arg14[%17, %c0_17, %c0_18] : memref<8x2x128xf32, #tpu.memory_space<vmem>>, vector<1x2x128xf32>
    %19 = vector.shape_cast %18 : vector<1x2x128xf32> to vector<2x128xf32>
    %20 = arith.truncf %14 : vector<2x32xf32> to vector<2x32xbf16>
    %cst_19 = arith.constant dense<0.000000e+00> : vector<2x128xf32>
    %21 = tpu.matmul %20, %2, %cst_19 {dimension_numbers = #tpu.dot_dimension_numbers<[1], [0], [0], [1], [0, 0, 1, 1], [], []>} : vector<2x32xbf16>, vector<32x128xbf16>, vector<2x128xf32> -> vector<2x128xf32>
    %22 = arith.addf %19, %21 : vector<2x128xf32>
    %23 = arith.negf %22 : vector<2x128xf32>
    %24 = math.exp %23 : vector<2x128xf32>
    %cst_20 = arith.constant 1.000000e+00 : f32
    %25 = vector.broadcast %cst_20 : f32 to vector<2x128xf32>
    %26 = arith.addf %25, %24 : vector<2x128xf32>
    %27 = arith.divf %25, %26 : vector<2x128xf32>
    %28 = vector.extract_strided_slice %27 {offsets = [0, 0], sizes = [2, 32], strides = [1, 1]} : vector<2x128xf32> to vector<2x32xf32>
    %29 = vector.extract_strided_slice %27 {offsets = [0, 32], sizes = [2, 32], strides = [1, 1]} : vector<2x128xf32> to vector<2x32xf32>
    %30 = vector.extract_strided_slice %27 {offsets = [0, 64], sizes = [2, 32], strides = [1, 1]} : vector<2x128xf32> to vector<2x32xf32>
    %31 = vector.extract_strided_slice %22 {offsets = [0, 96], sizes = [2, 32], strides = [1, 1]} : vector<2x128xf32> to vector<2x32xf32>
    %32 = math.tanh %31 : vector<2x32xf32>
    %33 = arith.mulf %29, %16 : vector<2x32xf32>
    %34 = arith.mulf %28, %32 : vector<2x32xf32>
    %35 = arith.addf %33, %34 : vector<2x32xf32>
    %36 = math.tanh %35 : vector<2x32xf32>
    %37 = arith.mulf %30, %36 : vector<2x32xf32>
    %38 = arith.index_cast %c0_i32 : i32 to index
    %c0_21 = arith.constant 0 : index
    %c0_22 = arith.constant 0 : index
    %39 = vector.load %arg15[%38, %c0_21, %c0_22] : memref<8x2x32xf32, #tpu.memory_space<vmem>>, vector<1x2x32xf32>
    %40 = vector.shape_cast %39 : vector<1x2x32xf32> to vector<2x32xf32>
    %41 = vector.shape_cast %37 : vector<2x32xf32> to vector<1x2x32xf32>
    tpu.vector_store %arg15[%38, %c0_21, %c0_22], %41 {strides = array<i32>} : memref<8x2x32xf32, #tpu.memory_space<vmem>>, vector<1x2x32xf32>,
    %c1_i32 = arith.constant 1 : i32
    %42 = arith.index_cast %c1_i32 : i32 to index
    %c0_23 = arith.constant 0 : index
    %c0_24 = arith.constant 0 : index
    %43 = vector.load %arg14[%42, %c0_23, %c0_24] : memref<8x2x128xf32, #tpu.memory_space<vmem>>, vector<1x2x128xf32>
    %44 = vector.shape_cast %43 : vector<1x2x128xf32> to vector<2x128xf32>
    %45 = arith.truncf %37 : vector<2x32xf32> to vector<2x32xbf16>
    %cst_25 = arith.constant dense<0.000000e+00> : vector<2x128xf32>
    %46 = tpu.matmul %45, %2, %cst_25 {dimension_numbers = #tpu.dot_dimension_numbers<[1], [0], [0], [1], [0, 0, 1, 1], [], []>} : vector<2x32xbf16>, vector<32x128xbf16>, vector<2x128xf32> -> vector<2x128xf32>
    %47 = arith.addf %44, %46 : vector<2x128xf32>
    %48 = arith.negf %47 : vector<2x128xf32>
    %49 = math.exp %48 : vector<2x128xf32>
    %cst_26 = arith.constant 1.000000e+00 : f32
    %50 = vector.broadcast %cst_26 : f32 to vector<2x128xf32>
    %51 = arith.addf %50, %49 : vector<2x128xf32>
    %52 = arith.divf %50, %51 : vector<2x128xf32>
    %53 = vector.extract_strided_slice %52 {offsets = [0, 0], sizes = [2, 32], strides = [1, 1]} : vector<2x128xf32> to vector<2x32xf32>
    %54 = vector.extract_strided_slice %52 {offsets = [0, 32], sizes = [2, 32], strides = [1, 1]} : vector<2x128xf32> to vector<2x32xf32>
    %55 = vector.extract_strided_slice %52 {offsets = [0, 64], sizes = [2, 32], strides = [1, 1]} : vector<2x128xf32> to vector<2x32xf32>
    %56 = vector.extract_strided_slice %47 {offsets = [0, 96], sizes = [2, 32], strides = [1, 1]} : vector<2x128xf32> to vector<2x32xf32>
    %57 = math.tanh %56 : vector<2x32xf32>
    %58 = arith.mulf %54, %35 : vector<2x32xf32>
    %59 = arith.mulf %53, %57 : vector<2x32xf32>
    %60 = arith.addf %58, %59 : vector<2x32xf32>
    %61 = math.tanh %60 : vector<2x32xf32>
    %62 = arith.mulf %55, %61 : vector<2x32xf32>
    %63 = arith.index_cast %c1_i32 : i32 to index
    %c0_27 = arith.constant 0 : index
    %c0_28 = arith.constant 0 : index
    %64 = vector.load %arg15[%63, %c0_27, %c0_28] : memref<8x2x32xf32, #tpu.memory_space<vmem>>, vector<1x2x32xf32>
    %65 = vector.shape_cast %64 : vector<1x2x32xf32> to vector<2x32xf32>
    %66 = vector.shape_cast %62 : vector<2x32xf32> to vector<1x2x32xf32>
    tpu.vector_store %arg15[%63, %c0_27, %c0_28], %66 {strides = array<i32>} : memref<8x2x32xf32, #tpu.memory_space<vmem>>, vector<1x2x32xf32>,
    %c2_i32 = arith.constant 2 : i32
    %67 = arith.index_cast %c2_i32 : i32 to index
    %c0_29 = arith.constant 0 : index
    %c0_30 = arith.constant 0 : index
    %68 = vector.load %arg14[%67, %c0_29, %c0_30] : memref<8x2x128xf32, #tpu.memory_space<vmem>>, vector<1x2x128xf32>
    %69 = vector.shape_cast %68 : vector<1x2x128xf32> to vector<2x128xf32>
    %70 = arith.truncf %62 : vector<2x32xf32> to vector<2x32xbf16>
    %cst_31 = arith.constant dense<0.000000e+00> : vector<2x128xf32>
    %71 = tpu.matmul %70, %2, %cst_31 {dimension_numbers = #tpu.dot_dimension_numbers<[1], [0], [0], [1], [0, 0, 1, 1], [], []>} : vector<2x32xbf16>, vector<32x128xbf16>, vector<2x128xf32> -> vector<2x128xf32>
    %72 = arith.addf %69, %71 : vector<2x128xf32>
    %73 = arith.negf %72 : vector<2x128xf32>
    %74 = math.exp %73 : vector<2x128xf32>
    %cst_32 = arith.constant 1.000000e+00 : f32
    %75 = vector.broadcast %cst_32 : f32 to vector<2x128xf32>
    %76 = arith.addf %75, %74 : vector<2x128xf32>
    %77 = arith.divf %75, %76 : vector<2x128xf32>
    %78 = vector.extract_strided_slice %77 {offsets = [0, 0], sizes = [2, 32], strides = [1, 1]} : vector<2x128xf32> to vector<2x32xf32>
    %79 = vector.extract_strided_slice %77 {offsets = [0, 32], sizes = [2, 32], strides = [1, 1]} : vector<2x128xf32> to vector<2x32xf32>
    %80 = vector.extract_strided_slice %77 {offsets = [0, 64], sizes = [2, 32], strides = [1, 1]} : vector<2x128xf32> to vector<2x32xf32>
    %81 = vector.extract_strided_slice %72 {offsets = [0, 96], sizes = [2, 32], strides = [1, 1]} : vector<2x128xf32> to vector<2x32xf32>
    %82 = math.tanh %81 : vector<2x32xf32>
    %83 = arith.mulf %79, %60 : vector<2x32xf32>
    %84 = arith.mulf %78, %82 : vector<2x32xf32>
    %85 = arith.addf %83, %84 : vector<2x32xf32>
    %86 = math.tanh %85 : vector<2x32xf32>
    %87 = arith.mulf %80, %86 : vector<2x32xf32>
    %88 = arith.index_cast %c2_i32 : i32 to index
    %c0_33 = arith.constant 0 : index
    %c0_34 = arith.constant 0 : index
    %89 = vector.load %arg15[%88, %c0_33, %c0_34] : memref<8x2x32xf32, #tpu.memory_space<vmem>>, vector<1x2x32xf32>
    %90 = vector.shape_cast %89 : vector<1x2x32xf32> to vector<2x32xf32>
    %91 = vector.shape_cast %87 : vector<2x32xf32> to vector<1x2x32xf32>
    tpu.vector_store %arg15[%88, %c0_33, %c0_34], %91 {strides = array<i32>} : memref<8x2x32xf32, #tpu.memory_space<vmem>>, vector<1x2x32xf32>,
    %c3_i32 = arith.constant 3 : i32
    %92 = arith.index_cast %c3_i32 : i32 to index
    %c0_35 = arith.constant 0 : index
    %c0_36 = arith.constant 0 : index
    %93 = vector.load %arg14[%92, %c0_35, %c0_36] : memref<8x2x128xf32, #tpu.memory_space<vmem>>, vector<1x2x128xf32>
    %94 = vector.shape_cast %93 : vector<1x2x128xf32> to vector<2x128xf32>
    %95 = arith.truncf %87 : vector<2x32xf32> to vector<2x32xbf16>
    %cst_37 = arith.constant dense<0.000000e+00> : vector<2x128xf32>
    %96 = tpu.matmul %95, %2, %cst_37 {dimension_numbers = #tpu.dot_dimension_numbers<[1], [0], [0], [1], [0, 0, 1, 1], [], []>} : vector<2x32xbf16>, vector<32x128xbf16>, vector<2x128xf32> -> vector<2x128xf32>
    %97 = arith.addf %94, %96 : vector<2x128xf32>
    %98 = arith.negf %97 : vector<2x128xf32>
    %99 = math.exp %98 : vector<2x128xf32>
    %cst_38 = arith.constant 1.000000e+00 : f32
    %100 = vector.broadcast %cst_38 : f32 to vector<2x128xf32>
    %101 = arith.addf %100, %99 : vector<2x128xf32>
    %102 = arith.divf %100, %101 : vector<2x128xf32>
    %103 = vector.extract_strided_slice %102 {offsets = [0, 0], sizes = [2, 32], strides = [1, 1]} : vector<2x128xf32> to vector<2x32xf32>
    %104 = vector.extract_strided_slice %102 {offsets = [0, 32], sizes = [2, 32], strides = [1, 1]} : vector<2x128xf32> to vector<2x32xf32>
    %105 = vector.extract_strided_slice %102 {offsets = [0, 64], sizes = [2, 32], strides = [1, 1]} : vector<2x128xf32> to vector<2x32xf32>
    %106 = vector.extract_strided_slice %97 {offsets = [0, 96], sizes = [2, 32], strides = [1, 1]} : vector<2x128xf32> to vector<2x32xf32>
    %107 = math.tanh %106 : vector<2x32xf32>
    %108 = arith.mulf %104, %85 : vector<2x32xf32>
    %109 = arith.mulf %103, %107 : vector<2x32xf32>
    %110 = arith.addf %108, %109 : vector<2x32xf32>
    %111 = math.tanh %110 : vector<2x32xf32>
    %112 = arith.mulf %105, %111 : vector<2x32xf32>
    %113 = arith.index_cast %c3_i32 : i32 to index
    %c0_39 = arith.constant 0 : index
    %c0_40 = arith.constant 0 : index
    %114 = vector.load %arg15[%113, %c0_39, %c0_40] : memref<8x2x32xf32, #tpu.memory_space<vmem>>, vector<1x2x32xf32>
    %115 = vector.shape_cast %114 : vector<1x2x32xf32> to vector<2x32xf32>
    %116 = vector.shape_cast %112 : vector<2x32xf32> to vector<1x2x32xf32>
    tpu.vector_store %arg15[%113, %c0_39, %c0_40], %116 {strides = array<i32>} : memref<8x2x32xf32, #tpu.memory_space<vmem>>, vector<1x2x32xf32>,
    %c4_i32 = arith.constant 4 : i32
    %117 = arith.index_cast %c4_i32 : i32 to index
    %c0_41 = arith.constant 0 : index
    %c0_42 = arith.constant 0 : index
    %118 = vector.load %arg14[%117, %c0_41, %c0_42] : memref<8x2x128xf32, #tpu.memory_space<vmem>>, vector<1x2x128xf32>
    %119 = vector.shape_cast %118 : vector<1x2x128xf32> to vector<2x128xf32>
    %120 = arith.truncf %112 : vector<2x32xf32> to vector<2x32xbf16>
    %cst_43 = arith.constant dense<0.000000e+00> : vector<2x128xf32>
    %121 = tpu.matmul %120, %2, %cst_43 {dimension_numbers = #tpu.dot_dimension_numbers<[1], [0], [0], [1], [0, 0, 1, 1], [], []>} : vector<2x32xbf16>, vector<32x128xbf16>, vector<2x128xf32> -> vector<2x128xf32>
    %122 = arith.addf %119, %121 : vector<2x128xf32>
    %123 = arith.negf %122 : vector<2x128xf32>
    %124 = math.exp %123 : vector<2x128xf32>
    %cst_44 = arith.constant 1.000000e+00 : f32
    %125 = vector.broadcast %cst_44 : f32 to vector<2x128xf32>
    %126 = arith.addf %125, %124 : vector<2x128xf32>
    %127 = arith.divf %125, %126 : vector<2x128xf32>
    %128 = vector.extract_strided_slice %127 {offsets = [0, 0], sizes = [2, 32], strides = [1, 1]} : vector<2x128xf32> to vector<2x32xf32>
    %129 = vector.extract_strided_slice %127 {offsets = [0, 32], sizes = [2, 32], strides = [1, 1]} : vector<2x128xf32> to vector<2x32xf32>
    %130 = vector.extract_strided_slice %127 {offsets = [0, 64], sizes = [2, 32], strides = [1, 1]} : vector<2x128xf32> to vector<2x32xf32>
    %131 = vector.extract_strided_slice %122 {offsets = [0, 96], sizes = [2, 32], strides = [1, 1]} : vector<2x128xf32> to vector<2x32xf32>
    %132 = math.tanh %131 : vector<2x32xf32>
    %133 = arith.mulf %129, %110 : vector<2x32xf32>
    %134 = arith.mulf %128, %132 : vector<2x32xf32>
    %135 = arith.addf %133, %134 : vector<2x32xf32>
    %136 = math.tanh %135 : vector<2x32xf32>
    %137 = arith.mulf %130, %136 : vector<2x32xf32>
    %138 = arith.index_cast %c4_i32 : i32 to index
    %c0_45 = arith.constant 0 : index
    %c0_46 = arith.constant 0 : index
    %139 = vector.load %arg15[%138, %c0_45, %c0_46] : memref<8x2x32xf32, #tpu.memory_space<vmem>>, vector<1x2x32xf32>
    %140 = vector.shape_cast %139 : vector<1x2x32xf32> to vector<2x32xf32>
    %141 = vector.shape_cast %137 : vector<2x32xf32> to vector<1x2x32xf32>
    tpu.vector_store %arg15[%138, %c0_45, %c0_46], %141 {strides = array<i32>} : memref<8x2x32xf32, #tpu.memory_space<vmem>>, vector<1x2x32xf32>,
    %c5_i32 = arith.constant 5 : i32
    %142 = arith.index_cast %c5_i32 : i32 to index
    %c0_47 = arith.constant 0 : index
    %c0_48 = arith.constant 0 : index
    %143 = vector.load %arg14[%142, %c0_47, %c0_48] : memref<8x2x128xf32, #tpu.memory_space<vmem>>, vector<1x2x128xf32>
    %144 = vector.shape_cast %143 : vector<1x2x128xf32> to vector<2x128xf32>
    %145 = arith.truncf %137 : vector<2x32xf32> to vector<2x32xbf16>
    %cst_49 = arith.constant dense<0.000000e+00> : vector<2x128xf32>
    %146 = tpu.matmul %145, %2, %cst_49 {dimension_numbers = #tpu.dot_dimension_numbers<[1], [0], [0], [1], [0, 0, 1, 1], [], []>} : vector<2x32xbf16>, vector<32x128xbf16>, vector<2x128xf32> -> vector<2x128xf32>
    %147 = arith.addf %144, %146 : vector<2x128xf32>
    %148 = arith.negf %147 : vector<2x128xf32>
    %149 = math.exp %148 : vector<2x128xf32>
    %cst_50 = arith.constant 1.000000e+00 : f32
    %150 = vector.broadcast %cst_50 : f32 to vector<2x128xf32>
    %151 = arith.addf %150, %149 : vector<2x128xf32>
    %152 = arith.divf %150, %151 : vector<2x128xf32>
    %153 = vector.extract_strided_slice %152 {offsets = [0, 0], sizes = [2, 32], strides = [1, 1]} : vector<2x128xf32> to vector<2x32xf32>
    %154 = vector.extract_strided_slice %152 {offsets = [0, 32], sizes = [2, 32], strides = [1, 1]} : vector<2x128xf32> to vector<2x32xf32>
    %155 = vector.extract_strided_slice %152 {offsets = [0, 64], sizes = [2, 32], strides = [1, 1]} : vector<2x128xf32> to vector<2x32xf32>
    %156 = vector.extract_strided_slice %147 {offsets = [0, 96], sizes = [2, 32], strides = [1, 1]} : vector<2x128xf32> to vector<2x32xf32>
    %157 = math.tanh %156 : vector<2x32xf32>
    %158 = arith.mulf %154, %135 : vector<2x32xf32>
    %159 = arith.mulf %153, %157 : vector<2x32xf32>
    %160 = arith.addf %158, %159 : vector<2x32xf32>
    %161 = math.tanh %160 : vector<2x32xf32>
    %162 = arith.mulf %155, %161 : vector<2x32xf32>
    %163 = arith.index_cast %c5_i32 : i32 to index
    %c0_51 = arith.constant 0 : index
    %c0_52 = arith.constant 0 : index
    %164 = vector.load %arg15[%163, %c0_51, %c0_52] : memref<8x2x32xf32, #tpu.memory_space<vmem>>, vector<1x2x32xf32>
    %165 = vector.shape_cast %164 : vector<1x2x32xf32> to vector<2x32xf32>
    %166 = vector.shape_cast %162 : vector<2x32xf32> to vector<1x2x32xf32>
    tpu.vector_store %arg15[%163, %c0_51, %c0_52], %166 {strides = array<i32>} : memref<8x2x32xf32, #tpu.memory_space<vmem>>, vector<1x2x32xf32>,
    %c6_i32 = arith.constant 6 : i32
    %167 = arith.index_cast %c6_i32 : i32 to index
    %c0_53 = arith.constant 0 : index
    %c0_54 = arith.constant 0 : index
    %168 = vector.load %arg14[%167, %c0_53, %c0_54] : memref<8x2x128xf32, #tpu.memory_space<vmem>>, vector<1x2x128xf32>
    %169 = vector.shape_cast %168 : vector<1x2x128xf32> to vector<2x128xf32>
    %170 = arith.truncf %162 : vector<2x32xf32> to vector<2x32xbf16>
    %cst_55 = arith.constant dense<0.000000e+00> : vector<2x128xf32>
    %171 = tpu.matmul %170, %2, %cst_55 {dimension_numbers = #tpu.dot_dimension_numbers<[1], [0], [0], [1], [0, 0, 1, 1], [], []>} : vector<2x32xbf16>, vector<32x128xbf16>, vector<2x128xf32> -> vector<2x128xf32>
    %172 = arith.addf %169, %171 : vector<2x128xf32>
    %173 = arith.negf %172 : vector<2x128xf32>
    %174 = math.exp %173 : vector<2x128xf32>
    %cst_56 = arith.constant 1.000000e+00 : f32
    %175 = vector.broadcast %cst_56 : f32 to vector<2x128xf32>
    %176 = arith.addf %175, %174 : vector<2x128xf32>
    %177 = arith.divf %175, %176 : vector<2x128xf32>
    %178 = vector.extract_strided_slice %177 {offsets = [0, 0], sizes = [2, 32], strides = [1, 1]} : vector<2x128xf32> to vector<2x32xf32>
    %179 = vector.extract_strided_slice %177 {offsets = [0, 32], sizes = [2, 32], strides = [1, 1]} : vector<2x128xf32> to vector<2x32xf32>
    %180 = vector.extract_strided_slice %177 {offsets = [0, 64], sizes = [2, 32], strides = [1, 1]} : vector<2x128xf32> to vector<2x32xf32>
    %181 = vector.extract_strided_slice %172 {offsets = [0, 96], sizes = [2, 32], strides = [1, 1]} : vector<2x128xf32> to vector<2x32xf32>
    %182 = math.tanh %181 : vector<2x32xf32>
    %183 = arith.mulf %179, %160 : vector<2x32xf32>
    %184 = arith.mulf %178, %182 : vector<2x32xf32>
    %185 = arith.addf %183, %184 : vector<2x32xf32>
    %186 = math.tanh %185 : vector<2x32xf32>
    %187 = arith.mulf %180, %186 : vector<2x32xf32>
    %188 = arith.index_cast %c6_i32 : i32 to index
    %c0_57 = arith.constant 0 : index
    %c0_58 = arith.constant 0 : index
    %189 = vector.load %arg15[%188, %c0_57, %c0_58] : memref<8x2x32xf32, #tpu.memory_space<vmem>>, vector<1x2x32xf32>
    %190 = vector.shape_cast %189 : vector<1x2x32xf32> to vector<2x32xf32>
    %191 = vector.shape_cast %187 : vector<2x32xf32> to vector<1x2x32xf32>
    tpu.vector_store %arg15[%188, %c0_57, %c0_58], %191 {strides = array<i32>} : memref<8x2x32xf32, #tpu.memory_space<vmem>>, vector<1x2x32xf32>,
    %c7_i32 = arith.constant 7 : i32
    %192 = arith.index_cast %c7_i32 : i32 to index
    %c0_59 = arith.constant 0 : index
    %c0_60 = arith.constant 0 : index
    %193 = vector.load %arg14[%192, %c0_59, %c0_60] : memref<8x2x128xf32, #tpu.memory_space<vmem>>, vector<1x2x128xf32>
    %194 = vector.shape_cast %193 : vector<1x2x128xf32> to vector<2x128xf32>
    %195 = arith.truncf %187 : vector<2x32xf32> to vector<2x32xbf16>
    %cst_61 = arith.constant dense<0.000000e+00> : vector<2x128xf32>
    %196 = tpu.matmul %195, %2, %cst_61 {dimension_numbers = #tpu.dot_dimension_numbers<[1], [0], [0], [1], [0, 0, 1, 1], [], []>} : vector<2x32xbf16>, vector<32x128xbf16>, vector<2x128xf32> -> vector<2x128xf32>
    %197 = arith.addf %194, %196 : vector<2x128xf32>
    %198 = arith.negf %197 : vector<2x128xf32>
    %199 = math.exp %198 : vector<2x128xf32>
    %cst_62 = arith.constant 1.000000e+00 : f32
    %200 = vector.broadcast %cst_62 : f32 to vector<2x128xf32>
    %201 = arith.addf %200, %199 : vector<2x128xf32>
    %202 = arith.divf %200, %201 : vector<2x128xf32>
    %203 = vector.extract_strided_slice %202 {offsets = [0, 0], sizes = [2, 32], strides = [1, 1]} : vector<2x128xf32> to vector<2x32xf32>
    %204 = vector.extract_strided_slice %202 {offsets = [0, 32], sizes = [2, 32], strides = [1, 1]} : vector<2x128xf32> to vector<2x32xf32>
    %205 = vector.extract_strided_slice %202 {offsets = [0, 64], sizes = [2, 32], strides = [1, 1]} : vector<2x128xf32> to vector<2x32xf32>
    %206 = vector.extract_strided_slice %197 {offsets = [0, 96], sizes = [2, 32], strides = [1, 1]} : vector<2x128xf32> to vector<2x32xf32>
    %207 = math.tanh %206 : vector<2x32xf32>
    %208 = arith.mulf %204, %185 : vector<2x32xf32>
    %209 = arith.mulf %203, %207 : vector<2x32xf32>
    %210 = arith.addf %208, %209 : vector<2x32xf32>
    %211 = math.tanh %210 : vector<2x32xf32>
    %212 = arith.mulf %205, %211 : vector<2x32xf32>
    %213 = arith.index_cast %c7_i32 : i32 to index
    %c0_63 = arith.constant 0 : index
    %c0_64 = arith.constant 0 : index
    %214 = vector.load %arg15[%213, %c0_63, %c0_64] : memref<8x2x32xf32, #tpu.memory_space<vmem>>, vector<1x2x32xf32>
    %215 = vector.shape_cast %214 : vector<1x2x32xf32> to vector<2x32xf32>
    %216 = vector.shape_cast %212 : vector<2x32xf32> to vector<1x2x32xf32>
    tpu.vector_store %arg15[%213, %c0_63, %c0_64], %216 {strides = array<i32>} : memref<8x2x32xf32, #tpu.memory_space<vmem>>, vector<1x2x32xf32>,
    %c8_i32 = arith.constant 8 : i32
    %c0_65 = arith.constant 0 : index
    %c0_66 = arith.constant 0 : index
    %c0_67 = arith.constant 0 : index
    %217 = vector.load %arg12[%c0_65, %c0_66, %c0_67] : memref<2x2x32xf32, #tpu.memory_space<vmem>>, vector<1x2x32xf32>
    %218 = vector.shape_cast %217 : vector<1x2x32xf32> to vector<2x32xf32>
    %219 = vector.shape_cast %212 : vector<2x32xf32> to vector<1x2x32xf32>
    tpu.vector_store %arg12[%c0_65, %c0_66, %c0_67], %219 {strides = array<i32>} : memref<2x2x32xf32, #tpu.memory_space<vmem>>, vector<1x2x32xf32>,
    %c0_68 = arith.constant 0 : index
    %c0_69 = arith.constant 0 : index
    %c0_70 = arith.constant 0 : index
    %220 = vector.load %arg13[%c0_68, %c0_69, %c0_70] : memref<2x2x32xf32, #tpu.memory_space<vmem>>, vector<1x2x32xf32>
    %221 = vector.shape_cast %220 : vector<1x2x32xf32> to vector<2x32xf32>
    %222 = vector.shape_cast %210 : vector<2x32xf32> to vector<1x2x32xf32>
    tpu.vector_store %arg13[%c0_68, %c0_69, %c0_70], %222 {strides = array<i32>} : memref<2x2x32xf32, #tpu.memory_space<vmem>>, vector<1x2x32xf32>,
    %c0_71 = arith.constant 0 : index
    %c0_72 = arith.constant 0 : index
    %223 = vector.load %arg6[%c0_71, %c0_72] : memref<32x128xf32, #tpu.memory_space<vmem>>, vector<32x128xf32>
    %c0_73 = arith.constant 0 : index
    %c0_74 = arith.constant 0 : index
    %224 = vector.load %arg7[%c0_73, %c0_74] : memref<32x128xf32, #tpu.memory_space<vmem>>, vector<32x128xf32>
    %225 = arith.truncf %224 : vector<32x128xf32> to vector<32x128xbf16>
    %c0_75 = arith.constant 0 : index
    %c0_76 = arith.constant 0 : index
    %226 = vector.load %arg8[%c0_75, %c0_76] : memref<1x128xf32, #tpu.memory_space<vmem>>, vector<1x128xf32>
    %c0_77 = arith.constant 0 : index
    %c0_78 = arith.constant 0 : index
    %c0_79 = arith.constant 0 : index
    %227 = vector.load %arg15[%c0_77, %c0_78, %c0_79] : memref<8x2x32xf32, #tpu.memory_space<vmem>>, vector<8x2x32xf32>
    %228 = vector.shape_cast %227 : vector<8x2x32xf32> to vector<16x32xf32>
    %229 = arith.truncf %228 : vector<16x32xf32> to vector<16x32xbf16>
    %230 = arith.truncf %223 : vector<32x128xf32> to vector<32x128xbf16>
    %cst_80 = arith.constant dense<0.000000e+00> : vector<16x128xf32>
    %231 = tpu.matmul %229, %230, %cst_80 {dimension_numbers = #tpu.dot_dimension_numbers<[1], [0], [0], [1], [0, 0, 1, 1], [], []>} : vector<16x32xbf16>, vector<32x128xbf16>, vector<16x128xf32> -> vector<16x128xf32>
    %232 = vector.broadcast %226 : vector<1x128xf32> to vector<16x128xf32>
    %233 = arith.addf %231, %232 : vector<16x128xf32>
    %234 = vector.shape_cast %233 : vector<16x128xf32> to vector<8x2x128xf32>
    %c0_81 = arith.constant 0 : index
    %c0_82 = arith.constant 0 : index
    %c0_83 = arith.constant 0 : index
    %235 = vector.load %arg14[%c0_81, %c0_82, %c0_83] : memref<8x2x128xf32, #tpu.memory_space<vmem>>, vector<8x2x128xf32>
    tpu.vector_store %arg14[%c0_81, %c0_82, %c0_83], %234 {strides = array<i32>} : memref<8x2x128xf32, #tpu.memory_space<vmem>>, vector<8x2x128xf32>,
    %c1 = arith.constant 1 : index
    %c0_84 = arith.constant 0 : index
    %c0_85 = arith.constant 0 : index
    %236 = vector.load %arg1[%c1, %c0_84, %c0_85] : memref<2x2x32xf32, #tpu.memory_space<vmem>>, vector<1x2x32xf32>
    %237 = vector.shape_cast %236 : vector<1x2x32xf32> to vector<2x32xf32>
    %c1_86 = arith.constant 1 : index
    %c0_87 = arith.constant 0 : index
    %c0_88 = arith.constant 0 : index
    %238 = vector.load %arg2[%c1_86, %c0_87, %c0_88] : memref<2x2x32xf32, #tpu.memory_space<vmem>>, vector<1x2x32xf32>
    %239 = vector.shape_cast %238 : vector<1x2x32xf32> to vector<2x32xf32>
    %c0_i32_89 = arith.constant 0 : i32
    %240 = arith.index_cast %c0_i32_89 : i32 to index
    %c0_90 = arith.constant 0 : index
    %c0_91 = arith.constant 0 : index
    %241 = vector.load %arg14[%240, %c0_90, %c0_91] : memref<8x2x128xf32, #tpu.memory_space<vmem>>, vector<1x2x128xf32>
    %242 = vector.shape_cast %241 : vector<1x2x128xf32> to vector<2x128xf32>
    %243 = arith.truncf %237 : vector<2x32xf32> to vector<2x32xbf16>
    %cst_92 = arith.constant dense<0.000000e+00> : vector<2x128xf32>
    %244 = tpu.matmul %243, %225, %cst_92 {dimension_numbers = #tpu.dot_dimension_numbers<[1], [0], [0], [1], [0, 0, 1, 1], [], []>} : vector<2x32xbf16>, vector<32x128xbf16>, vector<2x128xf32> -> vector<2x128xf32>
    %245 = arith.addf %242, %244 : vector<2x128xf32>
    %246 = arith.negf %245 : vector<2x128xf32>
    %247 = math.exp %246 : vector<2x128xf32>
    %cst_93 = arith.constant 1.000000e+00 : f32
    %248 = vector.broadcast %cst_93 : f32 to vector<2x128xf32>
    %249 = arith.addf %248, %247 : vector<2x128xf32>
    %250 = arith.divf %248, %249 : vector<2x128xf32>
    %251 = vector.extract_strided_slice %250 {offsets = [0, 0], sizes = [2, 32], strides = [1, 1]} : vector<2x128xf32> to vector<2x32xf32>
    %252 = vector.extract_strided_slice %250 {offsets = [0, 32], sizes = [2, 32], strides = [1, 1]} : vector<2x128xf32> to vector<2x32xf32>
    %253 = vector.extract_strided_slice %250 {offsets = [0, 64], sizes = [2, 32], strides = [1, 1]} : vector<2x128xf32> to vector<2x32xf32>
    %254 = vector.extract_strided_slice %245 {offsets = [0, 96], sizes = [2, 32], strides = [1, 1]} : vector<2x128xf32> to vector<2x32xf32>
    %255 = math.tanh %254 : vector<2x32xf32>
    %256 = arith.mulf %252, %239 : vector<2x32xf32>
    %257 = arith.mulf %251, %255 : vector<2x32xf32>
    %258 = arith.addf %256, %257 : vector<2x32xf32>
    %259 = math.tanh %258 : vector<2x32xf32>
    %260 = arith.mulf %253, %259 : vector<2x32xf32>
    %261 = arith.index_cast %c0_i32_89 : i32 to index
    %c0_94 = arith.constant 0 : index
    %c0_95 = arith.constant 0 : index
    %262 = vector.load %arg15[%261, %c0_94, %c0_95] : memref<8x2x32xf32, #tpu.memory_space<vmem>>, vector<1x2x32xf32>
    %263 = vector.shape_cast %262 : vector<1x2x32xf32> to vector<2x32xf32>
    %264 = vector.shape_cast %260 : vector<2x32xf32> to vector<1x2x32xf32>
    tpu.vector_store %arg15[%261, %c0_94, %c0_95], %264 {strides = array<i32>} : memref<8x2x32xf32, #tpu.memory_space<vmem>>, vector<1x2x32xf32>,
    %c1_i32_96 = arith.constant 1 : i32
    %265 = arith.index_cast %c1_i32_96 : i32 to index
    %c0_97 = arith.constant 0 : index
    %c0_98 = arith.constant 0 : index
    %266 = vector.load %arg14[%265, %c0_97, %c0_98] : memref<8x2x128xf32, #tpu.memory_space<vmem>>, vector<1x2x128xf32>
    %267 = vector.shape_cast %266 : vector<1x2x128xf32> to vector<2x128xf32>
    %268 = arith.truncf %260 : vector<2x32xf32> to vector<2x32xbf16>
    %cst_99 = arith.constant dense<0.000000e+00> : vector<2x128xf32>
    %269 = tpu.matmul %268, %225, %cst_99 {dimension_numbers = #tpu.dot_dimension_numbers<[1], [0], [0], [1], [0, 0, 1, 1], [], []>} : vector<2x32xbf16>, vector<32x128xbf16>, vector<2x128xf32> -> vector<2x128xf32>
    %270 = arith.addf %267, %269 : vector<2x128xf32>
    %271 = arith.negf %270 : vector<2x128xf32>
    %272 = math.exp %271 : vector<2x128xf32>
    %cst_100 = arith.constant 1.000000e+00 : f32
    %273 = vector.broadcast %cst_100 : f32 to vector<2x128xf32>
    %274 = arith.addf %273, %272 : vector<2x128xf32>
    %275 = arith.divf %273, %274 : vector<2x128xf32>
    %276 = vector.extract_strided_slice %275 {offsets = [0, 0], sizes = [2, 32], strides = [1, 1]} : vector<2x128xf32> to vector<2x32xf32>
    %277 = vector.extract_strided_slice %275 {offsets = [0, 32], sizes = [2, 32], strides = [1, 1]} : vector<2x128xf32> to vector<2x32xf32>
    %278 = vector.extract_strided_slice %275 {offsets = [0, 64], sizes = [2, 32], strides = [1, 1]} : vector<2x128xf32> to vector<2x32xf32>
    %279 = vector.extract_strided_slice %270 {offsets = [0, 96], sizes = [2, 32], strides = [1, 1]} : vector<2x128xf32> to vector<2x32xf32>
    %280 = math.tanh %279 : vector<2x32xf32>
    %281 = arith.mulf %277, %258 : vector<2x32xf32>
    %282 = arith.mulf %276, %280 : vector<2x32xf32>
    %283 = arith.addf %281, %282 : vector<2x32xf32>
    %284 = math.tanh %283 : vector<2x32xf32>
    %285 = arith.mulf %278, %284 : vector<2x32xf32>
    %286 = arith.index_cast %c1_i32_96 : i32 to index
    %c0_101 = arith.constant 0 : index
    %c0_102 = arith.constant 0 : index
    %287 = vector.load %arg15[%286, %c0_101, %c0_102] : memref<8x2x32xf32, #tpu.memory_space<vmem>>, vector<1x2x32xf32>
    %288 = vector.shape_cast %287 : vector<1x2x32xf32> to vector<2x32xf32>
    %289 = vector.shape_cast %285 : vector<2x32xf32> to vector<1x2x32xf32>
    tpu.vector_store %arg15[%286, %c0_101, %c0_102], %289 {strides = array<i32>} : memref<8x2x32xf32, #tpu.memory_space<vmem>>, vector<1x2x32xf32>,
    %c2_i32_103 = arith.constant 2 : i32
    %290 = arith.index_cast %c2_i32_103 : i32 to index
    %c0_104 = arith.constant 0 : index
    %c0_105 = arith.constant 0 : index
    %291 = vector.load %arg14[%290, %c0_104, %c0_105] : memref<8x2x128xf32, #tpu.memory_space<vmem>>, vector<1x2x128xf32>
    %292 = vector.shape_cast %291 : vector<1x2x128xf32> to vector<2x128xf32>
    %293 = arith.truncf %285 : vector<2x32xf32> to vector<2x32xbf16>
    %cst_106 = arith.constant dense<0.000000e+00> : vector<2x128xf32>
    %294 = tpu.matmul %293, %225, %cst_106 {dimension_numbers = #tpu.dot_dimension_numbers<[1], [0], [0], [1], [0, 0, 1, 1], [], []>} : vector<2x32xbf16>, vector<32x128xbf16>, vector<2x128xf32> -> vector<2x128xf32>
    %295 = arith.addf %292, %294 : vector<2x128xf32>
    %296 = arith.negf %295 : vector<2x128xf32>
    %297 = math.exp %296 : vector<2x128xf32>
    %cst_107 = arith.constant 1.000000e+00 : f32
    %298 = vector.broadcast %cst_107 : f32 to vector<2x128xf32>
    %299 = arith.addf %298, %297 : vector<2x128xf32>
    %300 = arith.divf %298, %299 : vector<2x128xf32>
    %301 = vector.extract_strided_slice %300 {offsets = [0, 0], sizes = [2, 32], strides = [1, 1]} : vector<2x128xf32> to vector<2x32xf32>
    %302 = vector.extract_strided_slice %300 {offsets = [0, 32], sizes = [2, 32], strides = [1, 1]} : vector<2x128xf32> to vector<2x32xf32>
    %303 = vector.extract_strided_slice %300 {offsets = [0, 64], sizes = [2, 32], strides = [1, 1]} : vector<2x128xf32> to vector<2x32xf32>
    %304 = vector.extract_strided_slice %295 {offsets = [0, 96], sizes = [2, 32], strides = [1, 1]} : vector<2x128xf32> to vector<2x32xf32>
    %305 = math.tanh %304 : vector<2x32xf32>
    %306 = arith.mulf %302, %283 : vector<2x32xf32>
    %307 = arith.mulf %301, %305 : vector<2x32xf32>
    %308 = arith.addf %306, %307 : vector<2x32xf32>
    %309 = math.tanh %308 : vector<2x32xf32>
    %310 = arith.mulf %303, %309 : vector<2x32xf32>
    %311 = arith.index_cast %c2_i32_103 : i32 to index
    %c0_108 = arith.constant 0 : index
    %c0_109 = arith.constant 0 : index
    %312 = vector.load %arg15[%311, %c0_108, %c0_109] : memref<8x2x32xf32, #tpu.memory_space<vmem>>, vector<1x2x32xf32>
    %313 = vector.shape_cast %312 : vector<1x2x32xf32> to vector<2x32xf32>
    %314 = vector.shape_cast %310 : vector<2x32xf32> to vector<1x2x32xf32>
    tpu.vector_store %arg15[%311, %c0_108, %c0_109], %314 {strides = array<i32>} : memref<8x2x32xf32, #tpu.memory_space<vmem>>, vector<1x2x32xf32>,
    %c3_i32_110 = arith.constant 3 : i32
    %315 = arith.index_cast %c3_i32_110 : i32 to index
    %c0_111 = arith.constant 0 : index
    %c0_112 = arith.constant 0 : index
    %316 = vector.load %arg14[%315, %c0_111, %c0_112] : memref<8x2x128xf32, #tpu.memory_space<vmem>>, vector<1x2x128xf32>
    %317 = vector.shape_cast %316 : vector<1x2x128xf32> to vector<2x128xf32>
    %318 = arith.truncf %310 : vector<2x32xf32> to vector<2x32xbf16>
    %cst_113 = arith.constant dense<0.000000e+00> : vector<2x128xf32>
    %319 = tpu.matmul %318, %225, %cst_113 {dimension_numbers = #tpu.dot_dimension_numbers<[1], [0], [0], [1], [0, 0, 1, 1], [], []>} : vector<2x32xbf16>, vector<32x128xbf16>, vector<2x128xf32> -> vector<2x128xf32>
    %320 = arith.addf %317, %319 : vector<2x128xf32>
    %321 = arith.negf %320 : vector<2x128xf32>
    %322 = math.exp %321 : vector<2x128xf32>
    %cst_114 = arith.constant 1.000000e+00 : f32
    %323 = vector.broadcast %cst_114 : f32 to vector<2x128xf32>
    %324 = arith.addf %323, %322 : vector<2x128xf32>
    %325 = arith.divf %323, %324 : vector<2x128xf32>
    %326 = vector.extract_strided_slice %325 {offsets = [0, 0], sizes = [2, 32], strides = [1, 1]} : vector<2x128xf32> to vector<2x32xf32>
    %327 = vector.extract_strided_slice %325 {offsets = [0, 32], sizes = [2, 32], strides = [1, 1]} : vector<2x128xf32> to vector<2x32xf32>
    %328 = vector.extract_strided_slice %325 {offsets = [0, 64], sizes = [2, 32], strides = [1, 1]} : vector<2x128xf32> to vector<2x32xf32>
    %329 = vector.extract_strided_slice %320 {offsets = [0, 96], sizes = [2, 32], strides = [1, 1]} : vector<2x128xf32> to vector<2x32xf32>
    %330 = math.tanh %329 : vector<2x32xf32>
    %331 = arith.mulf %327, %308 : vector<2x32xf32>
    %332 = arith.mulf %326, %330 : vector<2x32xf32>
    %333 = arith.addf %331, %332 : vector<2x32xf32>
    %334 = math.tanh %333 : vector<2x32xf32>
    %335 = arith.mulf %328, %334 : vector<2x32xf32>
    %336 = arith.index_cast %c3_i32_110 : i32 to index
    %c0_115 = arith.constant 0 : index
    %c0_116 = arith.constant 0 : index
    %337 = vector.load %arg15[%336, %c0_115, %c0_116] : memref<8x2x32xf32, #tpu.memory_space<vmem>>, vector<1x2x32xf32>
    %338 = vector.shape_cast %337 : vector<1x2x32xf32> to vector<2x32xf32>
    %339 = vector.shape_cast %335 : vector<2x32xf32> to vector<1x2x32xf32>
    tpu.vector_store %arg15[%336, %c0_115, %c0_116], %339 {strides = array<i32>} : memref<8x2x32xf32, #tpu.memory_space<vmem>>, vector<1x2x32xf32>,
    %c4_i32_117 = arith.constant 4 : i32
    %340 = arith.index_cast %c4_i32_117 : i32 to index
    %c0_118 = arith.constant 0 : index
    %c0_119 = arith.constant 0 : index
    %341 = vector.load %arg14[%340, %c0_118, %c0_119] : memref<8x2x128xf32, #tpu.memory_space<vmem>>, vector<1x2x128xf32>
    %342 = vector.shape_cast %341 : vector<1x2x128xf32> to vector<2x128xf32>
    %343 = arith.truncf %335 : vector<2x32xf32> to vector<2x32xbf16>
    %cst_120 = arith.constant dense<0.000000e+00> : vector<2x128xf32>
    %344 = tpu.matmul %343, %225, %cst_120 {dimension_numbers = #tpu.dot_dimension_numbers<[1], [0], [0], [1], [0, 0, 1, 1], [], []>} : vector<2x32xbf16>, vector<32x128xbf16>, vector<2x128xf32> -> vector<2x128xf32>
    %345 = arith.addf %342, %344 : vector<2x128xf32>
    %346 = arith.negf %345 : vector<2x128xf32>
    %347 = math.exp %346 : vector<2x128xf32>
    %cst_121 = arith.constant 1.000000e+00 : f32
    %348 = vector.broadcast %cst_121 : f32 to vector<2x128xf32>
    %349 = arith.addf %348, %347 : vector<2x128xf32>
    %350 = arith.divf %348, %349 : vector<2x128xf32>
    %351 = vector.extract_strided_slice %350 {offsets = [0, 0], sizes = [2, 32], strides = [1, 1]} : vector<2x128xf32> to vector<2x32xf32>
    %352 = vector.extract_strided_slice %350 {offsets = [0, 32], sizes = [2, 32], strides = [1, 1]} : vector<2x128xf32> to vector<2x32xf32>
    %353 = vector.extract_strided_slice %350 {offsets = [0, 64], sizes = [2, 32], strides = [1, 1]} : vector<2x128xf32> to vector<2x32xf32>
    %354 = vector.extract_strided_slice %345 {offsets = [0, 96], sizes = [2, 32], strides = [1, 1]} : vector<2x128xf32> to vector<2x32xf32>
    %355 = math.tanh %354 : vector<2x32xf32>
    %356 = arith.mulf %352, %333 : vector<2x32xf32>
    %357 = arith.mulf %351, %355 : vector<2x32xf32>
    %358 = arith.addf %356, %357 : vector<2x32xf32>
    %359 = math.tanh %358 : vector<2x32xf32>
    %360 = arith.mulf %353, %359 : vector<2x32xf32>
    %361 = arith.index_cast %c4_i32_117 : i32 to index
    %c0_122 = arith.constant 0 : index
    %c0_123 = arith.constant 0 : index
    %362 = vector.load %arg15[%361, %c0_122, %c0_123] : memref<8x2x32xf32, #tpu.memory_space<vmem>>, vector<1x2x32xf32>
    %363 = vector.shape_cast %362 : vector<1x2x32xf32> to vector<2x32xf32>
    %364 = vector.shape_cast %360 : vector<2x32xf32> to vector<1x2x32xf32>
    tpu.vector_store %arg15[%361, %c0_122, %c0_123], %364 {strides = array<i32>} : memref<8x2x32xf32, #tpu.memory_space<vmem>>, vector<1x2x32xf32>,
    %c5_i32_124 = arith.constant 5 : i32
    %365 = arith.index_cast %c5_i32_124 : i32 to index
    %c0_125 = arith.constant 0 : index
    %c0_126 = arith.constant 0 : index
    %366 = vector.load %arg14[%365, %c0_125, %c0_126] : memref<8x2x128xf32, #tpu.memory_space<vmem>>, vector<1x2x128xf32>
    %367 = vector.shape_cast %366 : vector<1x2x128xf32> to vector<2x128xf32>
    %368 = arith.truncf %360 : vector<2x32xf32> to vector<2x32xbf16>
    %cst_127 = arith.constant dense<0.000000e+00> : vector<2x128xf32>
    %369 = tpu.matmul %368, %225, %cst_127 {dimension_numbers = #tpu.dot_dimension_numbers<[1], [0], [0], [1], [0, 0, 1, 1], [], []>} : vector<2x32xbf16>, vector<32x128xbf16>, vector<2x128xf32> -> vector<2x128xf32>
    %370 = arith.addf %367, %369 : vector<2x128xf32>
    %371 = arith.negf %370 : vector<2x128xf32>
    %372 = math.exp %371 : vector<2x128xf32>
    %cst_128 = arith.constant 1.000000e+00 : f32
    %373 = vector.broadcast %cst_128 : f32 to vector<2x128xf32>
    %374 = arith.addf %373, %372 : vector<2x128xf32>
    %375 = arith.divf %373, %374 : vector<2x128xf32>
    %376 = vector.extract_strided_slice %375 {offsets = [0, 0], sizes = [2, 32], strides = [1, 1]} : vector<2x128xf32> to vector<2x32xf32>
    %377 = vector.extract_strided_slice %375 {offsets = [0, 32], sizes = [2, 32], strides = [1, 1]} : vector<2x128xf32> to vector<2x32xf32>
    %378 = vector.extract_strided_slice %375 {offsets = [0, 64], sizes = [2, 32], strides = [1, 1]} : vector<2x128xf32> to vector<2x32xf32>
    %379 = vector.extract_strided_slice %370 {offsets = [0, 96], sizes = [2, 32], strides = [1, 1]} : vector<2x128xf32> to vector<2x32xf32>
    %380 = math.tanh %379 : vector<2x32xf32>
    %381 = arith.mulf %377, %358 : vector<2x32xf32>
    %382 = arith.mulf %376, %380 : vector<2x32xf32>
    %383 = arith.addf %381, %382 : vector<2x32xf32>
    %384 = math.tanh %383 : vector<2x32xf32>
    %385 = arith.mulf %378, %384 : vector<2x32xf32>
    %386 = arith.index_cast %c5_i32_124 : i32 to index
    %c0_129 = arith.constant 0 : index
    %c0_130 = arith.constant 0 : index
    %387 = vector.load %arg15[%386, %c0_129, %c0_130] : memref<8x2x32xf32, #tpu.memory_space<vmem>>, vector<1x2x32xf32>
    %388 = vector.shape_cast %387 : vector<1x2x32xf32> to vector<2x32xf32>
    %389 = vector.shape_cast %385 : vector<2x32xf32> to vector<1x2x32xf32>
    tpu.vector_store %arg15[%386, %c0_129, %c0_130], %389 {strides = array<i32>} : memref<8x2x32xf32, #tpu.memory_space<vmem>>, vector<1x2x32xf32>,
    %c6_i32_131 = arith.constant 6 : i32
    %390 = arith.index_cast %c6_i32_131 : i32 to index
    %c0_132 = arith.constant 0 : index
    %c0_133 = arith.constant 0 : index
    %391 = vector.load %arg14[%390, %c0_132, %c0_133] : memref<8x2x128xf32, #tpu.memory_space<vmem>>, vector<1x2x128xf32>
    %392 = vector.shape_cast %391 : vector<1x2x128xf32> to vector<2x128xf32>
    %393 = arith.truncf %385 : vector<2x32xf32> to vector<2x32xbf16>
    %cst_134 = arith.constant dense<0.000000e+00> : vector<2x128xf32>
    %394 = tpu.matmul %393, %225, %cst_134 {dimension_numbers = #tpu.dot_dimension_numbers<[1], [0], [0], [1], [0, 0, 1, 1], [], []>} : vector<2x32xbf16>, vector<32x128xbf16>, vector<2x128xf32> -> vector<2x128xf32>
    %395 = arith.addf %392, %394 : vector<2x128xf32>
    %396 = arith.negf %395 : vector<2x128xf32>
    %397 = math.exp %396 : vector<2x128xf32>
    %cst_135 = arith.constant 1.000000e+00 : f32
    %398 = vector.broadcast %cst_135 : f32 to vector<2x128xf32>
    %399 = arith.addf %398, %397 : vector<2x128xf32>
    %400 = arith.divf %398, %399 : vector<2x128xf32>
    %401 = vector.extract_strided_slice %400 {offsets = [0, 0], sizes = [2, 32], strides = [1, 1]} : vector<2x128xf32> to vector<2x32xf32>
    %402 = vector.extract_strided_slice %400 {offsets = [0, 32], sizes = [2, 32], strides = [1, 1]} : vector<2x128xf32> to vector<2x32xf32>
    %403 = vector.extract_strided_slice %400 {offsets = [0, 64], sizes = [2, 32], strides = [1, 1]} : vector<2x128xf32> to vector<2x32xf32>
    %404 = vector.extract_strided_slice %395 {offsets = [0, 96], sizes = [2, 32], strides = [1, 1]} : vector<2x128xf32> to vector<2x32xf32>
    %405 = math.tanh %404 : vector<2x32xf32>
    %406 = arith.mulf %402, %383 : vector<2x32xf32>
    %407 = arith.mulf %401, %405 : vector<2x32xf32>
    %408 = arith.addf %406, %407 : vector<2x32xf32>
    %409 = math.tanh %408 : vector<2x32xf32>
    %410 = arith.mulf %403, %409 : vector<2x32xf32>
    %411 = arith.index_cast %c6_i32_131 : i32 to index
    %c0_136 = arith.constant 0 : index
    %c0_137 = arith.constant 0 : index
    %412 = vector.load %arg15[%411, %c0_136, %c0_137] : memref<8x2x32xf32, #tpu.memory_space<vmem>>, vector<1x2x32xf32>
    %413 = vector.shape_cast %412 : vector<1x2x32xf32> to vector<2x32xf32>
    %414 = vector.shape_cast %410 : vector<2x32xf32> to vector<1x2x32xf32>
    tpu.vector_store %arg15[%411, %c0_136, %c0_137], %414 {strides = array<i32>} : memref<8x2x32xf32, #tpu.memory_space<vmem>>, vector<1x2x32xf32>,
    %c7_i32_138 = arith.constant 7 : i32
    %415 = arith.index_cast %c7_i32_138 : i32 to index
    %c0_139 = arith.constant 0 : index
    %c0_140 = arith.constant 0 : index
    %416 = vector.load %arg14[%415, %c0_139, %c0_140] : memref<8x2x128xf32, #tpu.memory_space<vmem>>, vector<1x2x128xf32>
    %417 = vector.shape_cast %416 : vector<1x2x128xf32> to vector<2x128xf32>
    %418 = arith.truncf %410 : vector<2x32xf32> to vector<2x32xbf16>
    %cst_141 = arith.constant dense<0.000000e+00> : vector<2x128xf32>
    %419 = tpu.matmul %418, %225, %cst_141 {dimension_numbers = #tpu.dot_dimension_numbers<[1], [0], [0], [1], [0, 0, 1, 1], [], []>} : vector<2x32xbf16>, vector<32x128xbf16>, vector<2x128xf32> -> vector<2x128xf32>
    %420 = arith.addf %417, %419 : vector<2x128xf32>
    %421 = arith.negf %420 : vector<2x128xf32>
    %422 = math.exp %421 : vector<2x128xf32>
    %cst_142 = arith.constant 1.000000e+00 : f32
    %423 = vector.broadcast %cst_142 : f32 to vector<2x128xf32>
    %424 = arith.addf %423, %422 : vector<2x128xf32>
    %425 = arith.divf %423, %424 : vector<2x128xf32>
    %426 = vector.extract_strided_slice %425 {offsets = [0, 0], sizes = [2, 32], strides = [1, 1]} : vector<2x128xf32> to vector<2x32xf32>
    %427 = vector.extract_strided_slice %425 {offsets = [0, 32], sizes = [2, 32], strides = [1, 1]} : vector<2x128xf32> to vector<2x32xf32>
    %428 = vector.extract_strided_slice %425 {offsets = [0, 64], sizes = [2, 32], strides = [1, 1]} : vector<2x128xf32> to vector<2x32xf32>
    %429 = vector.extract_strided_slice %420 {offsets = [0, 96], sizes = [2, 32], strides = [1, 1]} : vector<2x128xf32> to vector<2x32xf32>
    %430 = math.tanh %429 : vector<2x32xf32>
    %431 = arith.mulf %427, %408 : vector<2x32xf32>
    %432 = arith.mulf %426, %430 : vector<2x32xf32>
    %433 = arith.addf %431, %432 : vector<2x32xf32>
    %434 = math.tanh %433 : vector<2x32xf32>
    %435 = arith.mulf %428, %434 : vector<2x32xf32>
    %436 = arith.index_cast %c7_i32_138 : i32 to index
    %c0_143 = arith.constant 0 : index
    %c0_144 = arith.constant 0 : index
    %437 = vector.load %arg15[%436, %c0_143, %c0_144] : memref<8x2x32xf32, #tpu.memory_space<vmem>>, vector<1x2x32xf32>
    %438 = vector.shape_cast %437 : vector<1x2x32xf32> to vector<2x32xf32>
    %439 = vector.shape_cast %435 : vector<2x32xf32> to vector<1x2x32xf32>
    tpu.vector_store %arg15[%436, %c0_143, %c0_144], %439 {strides = array<i32>} : memref<8x2x32xf32, #tpu.memory_space<vmem>>, vector<1x2x32xf32>,
    %c8_i32_145 = arith.constant 8 : i32
    %c1_146 = arith.constant 1 : index
    %c0_147 = arith.constant 0 : index
    %c0_148 = arith.constant 0 : index
    %440 = vector.load %arg12[%c1_146, %c0_147, %c0_148] : memref<2x2x32xf32, #tpu.memory_space<vmem>>, vector<1x2x32xf32>
    %441 = vector.shape_cast %440 : vector<1x2x32xf32> to vector<2x32xf32>
    %442 = vector.shape_cast %435 : vector<2x32xf32> to vector<1x2x32xf32>
    tpu.vector_store %arg12[%c1_146, %c0_147, %c0_148], %442 {strides = array<i32>} : memref<2x2x32xf32, #tpu.memory_space<vmem>>, vector<1x2x32xf32>,
    %c1_149 = arith.constant 1 : index
    %c0_150 = arith.constant 0 : index
    %c0_151 = arith.constant 0 : index
    %443 = vector.load %arg13[%c1_149, %c0_150, %c0_151] : memref<2x2x32xf32, #tpu.memory_space<vmem>>, vector<1x2x32xf32>
    %444 = vector.shape_cast %443 : vector<1x2x32xf32> to vector<2x32xf32>
    %445 = vector.shape_cast %433 : vector<2x32xf32> to vector<1x2x32xf32>
    tpu.vector_store %arg13[%c1_149, %c0_150, %c0_151], %445 {strides = array<i32>} : memref<2x2x32xf32, #tpu.memory_space<vmem>>, vector<1x2x32xf32>,
    %c0_152 = arith.constant 0 : index
    %c0_153 = arith.constant 0 : index
    %c0_154 = arith.constant 0 : index
    %446 = vector.load %arg15[%c0_152, %c0_153, %c0_154] : memref<8x2x32xf32, #tpu.memory_space<vmem>>, vector<8x2x32xf32>
    %447 = vector.shape_cast %446 : vector<8x2x32xf32> to vector<16x32xf32>
    %448 = arith.truncf %447 : vector<16x32xf32> to vector<16x32xbf16>
    %c0_155 = arith.constant 0 : index
    %c0_156 = arith.constant 0 : index
    %449 = vector.load %arg9[%c0_155, %c0_156] : memref<32x4xf32, #tpu.memory_space<vmem>>, vector<32x4xf32>
    %450 = arith.truncf %449 : vector<32x4xf32> to vector<32x4xbf16>
    %cst_157 = arith.constant dense<0.000000e+00> : vector<16x4xf32>
    %451 = tpu.matmul %448, %450, %cst_157 {dimension_numbers = #tpu.dot_dimension_numbers<[1], [0], [0], [1], [0, 0, 1, 1], [], []>} : vector<16x32xbf16>, vector<32x4xbf16>, vector<16x4xf32> -> vector<16x4xf32>
    %c0_158 = arith.constant 0 : index
    %c0_159 = arith.constant 0 : index
    %452 = vector.load %arg10[%c0_158, %c0_159] : memref<1x4xf32, #tpu.memory_space<vmem>>, vector<1x4xf32>
    %453 = vector.broadcast %452 : vector<1x4xf32> to vector<16x4xf32>
    %454 = arith.addf %451, %453 : vector<16x4xf32>
    %455 = vector.shape_cast %454 : vector<16x4xf32> to vector<8x2x4xf32>
    %c0_160 = arith.constant 0 : index
    %c0_161 = arith.constant 0 : index
    %c0_162 = arith.constant 0 : index
    %456 = vector.load %arg11[%c0_160, %c0_161, %c0_162] : memref<8x2x4xf32, #tpu.memory_space<vmem>>, vector<8x2x4xf32>
    tpu.vector_store %arg11[%c0_160, %c0_161, %c0_162], %455 {strides = array<i32>} : memref<8x2x4xf32, #tpu.memory_space<vmem>>, vector<8x2x4xf32>,
    return
  }
}

</mosaic_0001>

<llo_original>
// kernel: rnn_forward.1
$region0: #{rnn_forward.1}
  #allocation0 [shape = 'u32[]', space=smem, size = 0x4, offset = 0x4, fixed_abs, tag = 'smem constant byte address 0x4 - core index']
  #allocation1 [shape = 'u32[144,128]{1,0:T(1,128)}', space=vmem, size = 0x12000, scoped, tag = 'internal scratch']
  #allocation2 [shape = 'f32[8,2,128]{2,1,0:T(2,128)}', space=vmem, size = 0x2000, scoped, tag = 'scratch operand']
  #allocation3 [shape = 'f32[8,2,32]{2,1,0:T(2,128)}', space=vmem, size = 0x2000, scoped, tag = 'scratch operand']
  %s0 = inlined_call_operand.vmem [shape: f32[8,2,16], index: 0, kind: input, shape index: {}]
  %s1 = inlined_call_operand.hbm [shape: f32[2,2,32], index: 1, kind: input, shape index: {}]
  %s2 = inlined_call_operand.hbm [shape: f32[2,2,32], index: 2, kind: input, shape index: {}]
  %s3 = inlined_call_operand.hbm [shape: f32[16,128], index: 3, kind: input, shape index: {}]
  %s4 = inlined_call_operand.vmem [shape: f32[32,128], index: 4, kind: input, shape index: {}]
  %s5 = inlined_call_operand.vmem [shape: f32[1,128], index: 5, kind: input, shape index: {}]
  %s6 = inlined_call_operand.vmem [shape: f32[32,128], index: 6, kind: input, shape index: {}]
  %s7 = inlined_call_operand.vmem [shape: f32[32,128], index: 7, kind: input, shape index: {}]
  %s8 = inlined_call_operand.vmem [shape: f32[1,128], index: 8, kind: input, shape index: {}]
  %s9 = inlined_call_operand.vmem [shape: f32[32,4], index: 9, kind: input, shape index: {}]
  %s10 = inlined_call_operand.hbm [shape: f32[1,4], index: 10, kind: input, shape index: {}]
  %s11 = inlined_call_operand.vmem [shape: f32[8,2,4], index: 11, kind: output, shape index: {0}]
  %s12 = inlined_call_operand.hbm [shape: f32[2,2,32], index: 12, kind: output, shape index: {1}]
  %s13 = inlined_call_operand.hbm [shape: f32[2,2,32], index: 13, kind: output, shape index: {2}]
  %14 = xla_tuple %s11, %s12, %s13
  %s15 = sld [smem:[#allocation0]]
  $region86: #{rnn_forward.1} parent=0
    _
  %s17 = ssub.s32 1, %s15
  %s18 = scalar_select 0, %s17, %s15
  $region1: #{rnn_forward.1} parent=0
    #allocation4 [shape = 'u8[2048]{0}', space=vmem, size = 0x800, scoped, tag = 'input window, operand 1, single buffered']
    #allocation5 [shape = 's32[1]{0}', space=sflag, size = 0x4, scoped, tag = 'scoped memory for rnn_forward.1']
    #allocation6 [shape = 's32[1]{0}', space=sflag, size = 0x4, scoped, tag = 'scoped memory for rnn_forward.1']
    #allocation7 [shape = 'u8[2048]{0}', space=vmem, size = 0x800, scoped, tag = 'input window, operand 2, single buffered']
    #allocation8 [shape = 's32[1]{0}', space=sflag, size = 0x4, scoped, tag = 'scoped memory for rnn_forward.1']
    #allocation9 [shape = 'u8[8192]{0}', space=vmem, size = 0x2000, scoped, tag = 'input window, operand 3, single buffered']
    #allocation10 [shape = 'u8[512]{0}', space=vmem, size = 0x400, scoped, tag = 'input window, operand 10, single buffered']
    #allocation11 [shape = 's32[1]{0}', space=sflag, size = 0x4, scoped, tag = 'scoped memory for rnn_forward.1']
    #allocation12 [shape = 'u8[2048]{0}', space=vmem, size = 0x800, scoped, tag = 'output window, operand 1, single buffered']
    #allocation13 [shape = 'u8[2048]{0}', space=vmem, size = 0x800, scoped, tag = 'output window, operand 2, single buffered']
    #allocation14 [shape = 's32[1]{0}', space=sflag, size = 0x4, scoped, tag = 'scoped memory for rnn_forward.1']
    %19 = vsyncpa [#allocation5], 0
    %20 = vsyncpa [#allocation8], 0
    %21 = vsyncpa [#allocation11], 0
    %22 = vsyncpa [#allocation6], 0
    %23 = vsyncpa [#allocation14], 0
    // Predicated region
    $region2: #{rnn_forward.1} parent=1 // pred_check
      _
    $region3: #{rnn_forward.1} parent=1 // pred_check_branch
      %25 = sbr.rel (0) target = $region5
    $region4: #{rnn_forward.1} parent=1 // pred_region
      _
    $region5: #{rnn_forward.1} parent=1 // pred_fallthru
      _
    // Predicated region
    $region6: #{rnn_forward.1} parent=1 // pred_check
      _
    $region7: #{rnn_forward.1} parent=1 // pred_check_branch
      %27 = sbr.rel (0) target = $region9
    $region8: #{rnn_forward.1} parent=1 // pred_region
      %s29 = ssub.s32 64, 64
      %30 = vsyncadd [#allocation5], %s29
      %s31 = sshll.u32 [#allocation4], 4
      %s32 = int_to_ptr.vmem [resolvable:$true] %s31
      %37 = dma.hbm_to_vmem [thread:$0]  %s1, 64, %s32, [#allocation5], 32, 32, 2
    $region9: #{rnn_forward.1} parent=1 // pred_fallthru
      _
    // Predicated region
    $region10: #{rnn_forward.1} parent=1 // pred_check
      _
    $region11: #{rnn_forward.1} parent=1 // pred_check_branch
      %39 = sbr.rel (0) target = $region13
    $region12: #{rnn_forward.1} parent=1 // pred_region
      %s41 = ssub.s32 64, 64
      %42 = vsyncadd [#allocation8], %s41
      %s43 = sshll.u32 [#allocation7], 4
      %s44 = int_to_ptr.vmem [resolvable:$true] %s43
      %49 = dma.hbm_to_vmem [thread:$0]  %s2, 64, %s44, [#allocation8], 32, 32, 2
    $region13: #{rnn_forward.1} parent=1 // pred_fallthru
      _
    // Predicated region
    $region14: #{rnn_forward.1} parent=1 // pred_check
      _
    $region15: #{rnn_forward.1} parent=1 // pred_check_branch
      %51 = sbr.rel (0) target = $region17
    $region16: #{rnn_forward.1} parent=1 // pred_region
      %s53 = ssub.s32 256, 256
      %54 = vsyncadd [#allocation8], %s53
      %s55 = sshll.u32 [#allocation9], 4
      %s56 = int_to_ptr.vmem [resolvable:$true] %s55
      %61 = dma.hbm_to_vmem [thread:$0]  %s3, 256, %s56, [#allocation8], 128, 128, 8
    $region17: #{rnn_forward.1} parent=1 // pred_fallthru
      _
    // Predicated region
    $region18: #{rnn_forward.1} parent=1 // pred_check
      _
    $region19: #{rnn_forward.1} parent=1 // pred_check_branch
      %63 = sbr.rel (0) target = $region21
    $region20: #{rnn_forward.1} parent=1 // pred_region
      _
    $region21: #{rnn_forward.1} parent=1 // pred_fallthru
      _
    // Predicated region
    $region22: #{rnn_forward.1} parent=1 // pred_check
      _
    $region23: #{rnn_forward.1} parent=1 // pred_check_branch
      %65 = sbr.rel (0) target = $region25
    $region24: #{rnn_forward.1} parent=1 // pred_region
      _
    $region25: #{rnn_forward.1} parent=1 // pred_fallthru
      _
    // Predicated region
    $region26: #{rnn_forward.1} parent=1 // pred_check
      _
    $region27: #{rnn_forward.1} parent=1 // pred_check_branch
      %67 = sbr.rel (0) target = $region29
    $region28: #{rnn_forward.1} parent=1 // pred_region
      _
    $region29: #{rnn_forward.1} parent=1 // pred_fallthru
      _
    // Predicated region
    $region30: #{rnn_forward.1} parent=1 // pred_check
      _
    $region31: #{rnn_forward.1} parent=1 // pred_check_branch
      %69 = sbr.rel (0) target = $region33
    $region32: #{rnn_forward.1} parent=1 // pred_region
      _
    $region33: #{rnn_forward.1} parent=1 // pred_fallthru
      _
    // Predicated region
    $region34: #{rnn_forward.1} parent=1 // pred_check
      _
    $region35: #{rnn_forward.1} parent=1 // pred_check_branch
      %71 = sbr.rel (0) target = $region37
    $region36: #{rnn_forward.1} parent=1 // pred_region
      _
    $region37: #{rnn_forward.1} parent=1 // pred_fallthru
      _
    // Predicated region
    $region38: #{rnn_forward.1} parent=1 // pred_check
      _
    $region39: #{rnn_forward.1} parent=1 // pred_check_branch
      %73 = sbr.rel (0) target = $region41
    $region40: #{rnn_forward.1} parent=1 // pred_region
      _
    $region41: #{rnn_forward.1} parent=1 // pred_fallthru
      _
    // Predicated region
    $region42: #{rnn_forward.1} parent=1 // pred_check
      _
    $region43: #{rnn_forward.1} parent=1 // pred_check_branch
      %75 = sbr.rel (0) target = $region45
    $region44: #{rnn_forward.1} parent=1 // pred_region
      %s77 = ssub.s32 16, 16
      %78 = vsyncadd [#allocation11], %s77
      %s80 = sshll.u32 [#allocation10], 4
      %s81 = int_to_ptr.vmem [resolvable:$true] %s80
      %83 = dma.hbm_to_vmem [thread:$0]  %s10, 16, %s81, [#allocation11]
    $region45: #{rnn_forward.1} parent=1 // pred_fallthru
      _
    // Predicated region
    $region46: #{rnn_forward.1} parent=1 // pred_check
      _
    $region47: #{rnn_forward.1} parent=1 // pred_check_branch
      %85 = sbr.rel (0) target = $region49
    $region48: #{rnn_forward.1} parent=1 // pred_region
      %86 = dma.done [#allocation5], 64
    $region49: #{rnn_forward.1} parent=1 // pred_fallthru
      _
    // Predicated region
    $region50: #{rnn_forward.1} parent=1 // pred_check
      _
    $region51: #{rnn_forward.1} parent=1 // pred_check_branch
      %88 = sbr.rel (0) target = $region53
    $region52: #{rnn_forward.1} parent=1 // pred_region
      %89 = dma.done [#allocation8], 64
    $region53: #{rnn_forward.1} parent=1 // pred_fallthru
      _
    // Predicated region
    $region54: #{rnn_forward.1} parent=1 // pred_check
      _
    $region55: #{rnn_forward.1} parent=1 // pred_check_branch
      %91 = sbr.rel (0) target = $region57
    $region56: #{rnn_forward.1} parent=1 // pred_region
      %92 = dma.done [#allocation8], 256
    $region57: #{rnn_forward.1} parent=1 // pred_fallthru
      _
    // Predicated region
    $region58: #{rnn_forward.1} parent=1 // pred_check
      _
    $region59: #{rnn_forward.1} parent=1 // pred_check_branch
      %94 = sbr.rel (0) target = $region61
    $region60: #{rnn_forward.1} parent=1 // pred_region
      %95 = dma.done [#allocation11], 16
    $region61: #{rnn_forward.1} parent=1 // pred_fallthru
      _
    %v97 = vld [vmem:[#allocation9] sm:$0xff]
    %v98 = vld [vmem:[#allocation9 + $0x8] sm:$0xff]
    %v99 = vld [vmem:[%s4] sm:$0xff]
    %v100 = vld [vmem:[%s4 + $0x8] sm:$0xff]
    %v101 = vld [vmem:[%s4 + $0x10] sm:$0xff]
    %v102 = vld [vmem:[%s4 + $0x18] sm:$0xff]
    %v103 = vpack.c.bf16 %v100, %v99
    %v104 = vpack.c.bf16 %v102, %v101
    %v105 = vld [vmem:[%s5] sm:$0x1]
    %v106 = vld [vmem:[%s0] sm:$0x3]
    %v107 = vld [vmem:[%s0 + $0x2] sm:$0x3]
    %v108 = vld [vmem:[%s0 + $0x4] sm:$0x3]
    %v109 = vld [vmem:[%s0 + $0x6] sm:$0x3]
    %v110 = vld [vmem:[%s0 + $0x8] sm:$0x3]
    %v111 = vld [vmem:[%s0 + $0xa] sm:$0x3]
    %v112 = vld [vmem:[%s0 + $0xc] sm:$0x3]
    %v113 = vld [vmem:[%s0 + $0xe] sm:$0x3]
    %v122 = vcombine.low %v106, %v107
    %v123 = vcombine.low %v108, %v109
    %v125 = vunpack.c.l.s4 1983009808
    %v126 = vunpack.c.0.s8 %v125
    %v127 = vlaneseq
    %v128 = vshrl.u32 %v127, 7
    %v129 = vsub.s32 %v126, %v128
    %v130 = vrot.slane %v122, %v129
    %v132 = vunpack.c.l.s4 1983009808
    %v133 = vunpack.c.0.s8 %v132
    %v134 = vlaneseq
    %v135 = vshrl.u32 %v134, 7
    %v136 = vsub.s32 %v133, %v135
    %v137 = vrot.slane %v123, %v136
    %v138 = vcombine.low %v130, %v137
    %v139 = vcombine.low %v110, %v111
    %v140 = vcombine.low %v112, %v113
    %v142 = vunpack.c.l.s4 1983009808
    %v143 = vunpack.c.0.s8 %v142
    %v144 = vlaneseq
    %v145 = vshrl.u32 %v144, 7
    %v146 = vsub.s32 %v143, %v145
    %v147 = vrot.slane %v139, %v146
    %v149 = vunpack.c.l.s4 1983009808
    %v150 = vunpack.c.0.s8 %v149
    %v151 = vlaneseq
    %v152 = vshrl.u32 %v151, 7
    %v153 = vsub.s32 %v150, %v152
    %v154 = vrot.slane %v140, %v153
    %v155 = vcombine.low %v147, %v154
    %v158 = vpack.c.bf16 %v155, %v138
    %v159 = vpack.c.bf16 %v98, %v97
    %v161 = vlaneseq
    %v162 = vshrl.u32 %v161, 7
    %v163 = vsub.s32 0, %v162
    %v164 = vrot.slane %v105, %v163
    %vm166 = vcmask 130048
    %v168 = vsel %vm166, %v158, 0
    %170 = vmatprep.subr.bf16.mxu0 0
    %171 = vmatpush1.bf16.msra.mxu0 %v159
    %172 = vmatprep.subr.bf16.mxu0 0
    %173 = vmatpush1.bf16.msra.mxu0 0
    %174 = vmatprep.subr.bf16.mxu0 0
    %175 = vmatpush1.bf16.msra.mxu0 0
    %176 = vmatprep.subr.bf16.mxu0 0
    %177 = vmatpush1.bf16.msra.mxu0 0
    %178 = vmatprep.subr.bf16.mxu0 0
    %179 = vmatpush1.bf16.msra.mxu0 0
    %180 = vmatprep.subr.bf16.mxu0 0
    %181 = vmatpush1.bf16.msra.mxu0 0
    %182 = vmatprep.subr.bf16.mxu0 0
    %183 = vmatpush1.bf16.msra.mxu0 0
    %184 = vmatprep.subr.bf16.mxu0 0
    %185 = vmatpush1.bf16.msra.mxu0 0
    %186 = vmatprep.subr.bf16.mxu0 0
    %187 = vmatpush1.bf16.msra.mxu0 0
    %188 = vmatprep.subr.bf16.mxu0 0
    %189 = vmatpush1.bf16.msra.mxu0 0
    %190 = vmatprep.subr.bf16.mxu0 0
    %191 = vmatpush1.bf16.msra.mxu0 0
    %192 = vmatprep.subr.bf16.mxu0 0
    %193 = vmatpush1.bf16.msra.mxu0 0
    %194 = vmatprep.subr.bf16.mxu0 0
    %195 = vmatpush1.bf16.msra.mxu0 0
    %196 = vmatprep.subr.bf16.mxu0 0
    %197 = vmatpush1.bf16.msra.mxu0 0
    %198 = vmatprep.subr.bf16.mxu0 0
    %199 = vmatpush1.bf16.msra.mxu0 0
    %200 = vmatprep.subr.bf16.mxu0 0
    %201 = vmatpush1.bf16.msra.mxu0 0
    %202 = vmatprep.mubr.bf16.mxu0 0
    %203 = vmatmul.mubr.bf16.gmra.mrb[0].mxu0 %v168
    %v204 = vpop.f32.mrb[0].mxu0
    %v205 = vadd.f32 %v164, %v204
    %v206 = vpop.f32.mrb[0].mxu0
    %v207 = vpop.f32.mrb[0].mxu0
    %v208 = vadd.f32 %v164, %v207
    %v209 = vpop.f32.mrb[0].mxu0
    %210 = vdwg.mxu0
    %v213 = vcombine.high %v205, %v205
    %v215 = vunpack.c.l.s4 1983009808
    %v216 = vunpack.c.0.s8 %v215
    %v217 = vlaneseq
    %v218 = vshrl.u32 %v217, 7
    %v219 = vsub.s32 %v216, %v218
    %v220 = vrot.slane %v205, %v219
    %v222 = vunpack.c.l.s4 1983009808
    %v223 = vunpack.c.0.s8 %v222
    %v224 = vlaneseq
    %v225 = vshrl.u32 %v224, 7
    %v226 = vsub.s32 %v223, %v225
    %v227 = vrot.slane %v213, %v226
    %v228 = vcombine.high %v220, %v220
    %v229 = vcombine.high %v227, %v227
    %v230 = vcombine.high %v208, %v208
    %v232 = vunpack.c.l.s4 1983009808
    %v233 = vunpack.c.0.s8 %v232
    %v234 = vlaneseq
    %v235 = vshrl.u32 %v234, 7
    %v236 = vsub.s32 %v233, %v235
    %v237 = vrot.slane %v208, %v236
    %v239 = vunpack.c.l.s4 1983009808
    %v240 = vunpack.c.0.s8 %v239
    %v241 = vlaneseq
    %v242 = vshrl.u32 %v241, 7
    %v243 = vsub.s32 %v240, %v242
    %v244 = vrot.slane %v230, %v243
    %v245 = vcombine.high %v237, %v237
    %v246 = vcombine.high %v244, %v244
    %255 = vst [vmem:[#allocation2] sm:$0x3] %v220
    %256 = vst [vmem:[#allocation2 + $0x2] sm:$0x3] %v228
    %257 = vst [vmem:[#allocation2 + $0x4] sm:$0x3] %v227
    %258 = vst [vmem:[#allocation2 + $0x6] sm:$0x3] %v229
    %259 = vst [vmem:[#allocation2 + $0x8] sm:$0x3] %v237
    %260 = vst [vmem:[#allocation2 + $0xa] sm:$0x3] %v245
    %261 = vst [vmem:[#allocation2 + $0xc] sm:$0x3] %v244
    %262 = vst [vmem:[#allocation2 + $0xe] sm:$0x3] %v246
    %v263 = vld [vmem:[#allocation4] sm:$0x3]
    %v264 = vld [vmem:[#allocation7] sm:$0x3]
    %v265 = vld [vmem:[#allocation2] sm:$0x3]
    %v266 = vpack.c.bf16 %v263, %v263
    %vm267 = vcmask 261120
    %v269 = vsel %vm267, %v266, 0
    %271 = vmatprep.subr.bf16.mxu0 0
    %272 = vmatpush1.bf16.msra.mxu0 %v103
    %273 = vmatprep.subr.bf16.mxu0 0
    %274 = vmatpush1.bf16.msra.mxu0 %v104
    %275 = vmatprep.subr.bf16.mxu0 0
    %276 = vmatpush1.bf16.msra.mxu0 0
    %277 = vmatprep.subr.bf16.mxu0 0
    %278 = vmatpush1.bf16.msra.mxu0 0
    %279 = vmatprep.subr.bf16.mxu0 0
    %280 = vmatpush1.bf16.msra.mxu0 0
    %281 = vmatprep.subr.bf16.mxu0 0
    %282 = vmatpush1.bf16.msra.mxu0 0
    %283 = vmatprep.subr.bf16.mxu0 0
    %284 = vmatpush1.bf16.msra.mxu0 0
    %285 = vmatprep.subr.bf16.mxu0 0
    %286 = vmatpush1.bf16.msra.mxu0 0
    %287 = vmatprep.subr.bf16.mxu0 0
    %288 = vmatpush1.bf16.msra.mxu0 0
    %289 = vmatprep.subr.bf16.mxu0 0
    %290 = vmatpush1.bf16.msra.mxu0 0
    %291 = vmatprep.subr.bf16.mxu0 0
    %292 = vmatpush1.bf16.msra.mxu0 0
    %293 = vmatprep.subr.bf16.mxu0 0
    %294 = vmatpush1.bf16.msra.mxu0 0
    %295 = vmatprep.subr.bf16.mxu0 0
    %296 = vmatpush1.bf16.msra.mxu0 0
    %297 = vmatprep.subr.bf16.mxu0 0
    %298 = vmatpush1.bf16.msra.mxu0 0
    %299 = vmatprep.subr.bf16.mxu0 0
    %300 = vmatpush1.bf16.msra.mxu0 0
    %301 = vmatprep.subr.bf16.mxu0 0
    %302 = vmatpush1.bf16.msra.mxu0 0
    %303 = vmatprep.mubr.bf16.mxu0 0
    %304 = vmatmul.mubr.bf16.gmra.mrb[0].mxu0 %v269
    %v305 = vpop.f32.mrb[0].mxu0
    %v306 = vadd.f32 0.0, %v305
    %v307 = vpop.f32.mrb[0].mxu0
    %v308 = vpop.f32.mrb[0].mxu0
    %v309 = vpop.f32.mrb[0].mxu0
    %310 = vdwg.mxu0
    %v311 = vadd.f32 %v265, %v306
    %v312 = vxor.u32 %v311, 2147483648
    %v313 = vmul.f32 %v312, 1.442695
    %v314 = vpow.pop %v313
    %v315 = vadd.f32 %v314, 1.0
    %v316 = vrcp.pop %v315
    %v317 = vmul.f32 1.0, %v316
    %v318 = vtanh.pop %v311
    %320 = vrot.lane.b32.xlu0 %v264, 32
    %v321 = vpop.permute.xlu0 %320
    %v323 = vmul.f32 %v317, %v321
    %325 = vrot.lane.b32.xlu0 %v318, 32
    %v326 = vpop.permute.xlu0 %325
    %v328 = vmul.f32 %v317, %v326
    %330 = vrot.lane.b32.xlu0 %v328, 32
    %v331 = vpop.permute.xlu0 %330
    %v333 = vadd.f32 %v323, %v331
    %v334 = vtanh.pop %v333
    %336 = vrot.lane.b32.xlu0 %v334, 32
    %v337 = vpop.permute.xlu0 %336
    %v339 = vmul.f32 %v317, %v337
    %341 = vrot.lane.b32.xlu0 %v339, 64
    %v342 = vpop.permute.xlu0 %341
    %vm344 = vcmask 254976
    %345 = vst.msk [vmem:[#allocation3] sm:$0x3] %vm344, %v342
    %s346 = scalar_lea.vmem [#allocation2], 2
    %v347 = vld [vmem:[%s346] sm:$0x3]
    %v348 = vpack.c.bf16 %v339, %v339
    %350 = vrot.lane.b32.xlu0 %v348, 64
    %v351 = vpop.permute.xlu0 %350
    %v353 = vsel %vm267, %v351, 0
    %355 = vmatprep.subr.bf16.mxu0 0
    %356 = vmatpush1.bf16.msra.mxu0 %v103
    %357 = vmatprep.subr.bf16.mxu0 0
    %358 = vmatpush1.bf16.msra.mxu0 %v104
    %359 = vmatprep.subr.bf16.mxu0 0
    %360 = vmatpush1.bf16.msra.mxu0 0
    %361 = vmatprep.subr.bf16.mxu0 0
    %362 = vmatpush1.bf16.msra.mxu0 0
    %363 = vmatprep.subr.bf16.mxu0 0
    %364 = vmatpush1.bf16.msra.mxu0 0
    %365 = vmatprep.subr.bf16.mxu0 0
    %366 = vmatpush1.bf16.msra.mxu0 0
    %367 = vmatprep.subr.bf16.mxu0 0
    %368 = vmatpush1.bf16.msra.mxu0 0
    %369 = vmatprep.subr.bf16.mxu0 0
    %370 = vmatpush1.bf16.msra.mxu0 0
    %371 = vmatprep.subr.bf16.mxu0 0
    %372 = vmatpush1.bf16.msra.mxu0 0
    %373 = vmatprep.subr.bf16.mxu0 0
    %374 = vmatpush1.bf16.msra.mxu0 0
    %375 = vmatprep.subr.bf16.mxu0 0
    %376 = vmatpush1.bf16.msra.mxu0 0
    %377 = vmatprep.subr.bf16.mxu0 0
    %378 = vmatpush1.bf16.msra.mxu0 0
    %379 = vmatprep.subr.bf16.mxu0 0
    %380 = vmatpush1.bf16.msra.mxu0 0
    %381 = vmatprep.subr.bf16.mxu0 0
    %382 = vmatpush1.bf16.msra.mxu0 0
    %383 = vmatprep.subr.bf16.mxu0 0
    %384 = vmatpush1.bf16.msra.mxu0 0
    %385 = vmatprep.subr.bf16.mxu0 0
    %386 = vmatpush1.bf16.msra.mxu0 0
    %387 = vmatprep.mubr.bf16.mxu0 0
    %388 = vmatmul.mubr.bf16.gmra.mrb[0].mxu0 %v353
    %v389 = vpop.f32.mrb[0].mxu0
    %v390 = vadd.f32 0.0, %v389
    %v391 = vpop.f32.mrb[0].mxu0
    %v392 = vpop.f32.mrb[0].mxu0
    %v393 = vpop.f32.mrb[0].mxu0
    %394 = vdwg.mxu0
    %v395 = vadd.f32 %v347, %v390
    %v396 = vxor.u32 %v395, 2147483648
    %v397 = vmul.f32 %v396, 1.442695
    %v398 = vpow.pop %v397
    %v399 = vadd.f32 %v398, 1.0
    %v400 = vrcp.pop %v399
    %v401 = vmul.f32 1.0, %v400
    %v402 = vtanh.pop %v395
    %v403 = vmul.f32 %v401, %v333
    %405 = vrot.lane.b32.xlu0 %v402, 32
    %v406 = vpop.permute.xlu0 %405
    %v408 = vmul.f32 %v401, %v406
    %410 = vrot.lane.b32.xlu0 %v408, 32
    %v411 = vpop.permute.xlu0 %410
    %v413 = vadd.f32 %v403, %v411
    %v414 = vtanh.pop %v413
    %416 = vrot.lane.b32.xlu0 %v414, 32
    %v417 = vpop.permute.xlu0 %416
    %v419 = vmul.f32 %v401, %v417
    %421 = vrot.lane.b32.xlu0 %v419, 64
    %v422 = vpop.permute.xlu0 %421
    %s424 = scalar_lea.vmem [#allocation3], 2
    %425 = vst.msk [vmem:[%s424] sm:$0x3] %vm344, %v422
    %s426 = scalar_lea.vmem [#allocation2], 4
    %v427 = vld [vmem:[%s426] sm:$0x3]
    %v428 = vpack.c.bf16 %v419, %v419
    %430 = vrot.lane.b32.xlu0 %v428, 64
    %v431 = vpop.permute.xlu0 %430
    %v433 = vsel %vm267, %v431, 0
    %435 = vmatprep.subr.bf16.mxu0 0
    %436 = vmatpush1.bf16.msra.mxu0 %v103
    %437 = vmatprep.subr.bf16.mxu0 0
    %438 = vmatpush1.bf16.msra.mxu0 %v104
    %439 = vmatprep.subr.bf16.mxu0 0
    %440 = vmatpush1.bf16.msra.mxu0 0
    %441 = vmatprep.subr.bf16.mxu0 0
    %442 = vmatpush1.bf16.msra.mxu0 0
    %443 = vmatprep.subr.bf16.mxu0 0
    %444 = vmatpush1.bf16.msra.mxu0 0
    %445 = vmatprep.subr.bf16.mxu0 0
    %446 = vmatpush1.bf16.msra.mxu0 0
    %447 = vmatprep.subr.bf16.mxu0 0
    %448 = vmatpush1.bf16.msra.mxu0 0
    %449 = vmatprep.subr.bf16.mxu0 0
    %450 = vmatpush1.bf16.msra.mxu0 0
    %451 = vmatprep.subr.bf16.mxu0 0
    %452 = vmatpush1.bf16.msra.mxu0 0
    %453 = vmatprep.subr.bf16.mxu0 0
    %454 = vmatpush1.bf16.msra.mxu0 0
    %455 = vmatprep.subr.bf16.mxu0 0
    %456 = vmatpush1.bf16.msra.mxu0 0
    %457 = vmatprep.subr.bf16.mxu0 0
    %458 = vmatpush1.bf16.msra.mxu0 0
    %459 = vmatprep.subr.bf16.mxu0 0
    %460 = vmatpush1.bf16.msra.mxu0 0
    %461 = vmatprep.subr.bf16.mxu0 0
    %462 = vmatpush1.bf16.msra.mxu0 0
    %463 = vmatprep.subr.bf16.mxu0 0
    %464 = vmatpush1.bf16.msra.mxu0 0
    %465 = vmatprep.subr.bf16.mxu0 0
    %466 = vmatpush1.bf16.msra.mxu0 0
    %467 = vmatprep.mubr.bf16.mxu0 0
    %468 = vmatmul.mubr.bf16.gmra.mrb[0].mxu0 %v433
    %v469 = vpop.f32.mrb[0].mxu0
    %v470 = vadd.f32 0.0, %v469
    %v471 = vpop.f32.mrb[0].mxu0
    %v472 = vpop.f32.mrb[0].mxu0
    %v473 = vpop.f32.mrb[0].mxu0
    %474 = vdwg.mxu0
    %v475 = vadd.f32 %v427, %v470
    %v476 = vxor.u32 %v475, 2147483648
    %v477 = vmul.f32 %v476, 1.442695
    %v478 = vpow.pop %v477
    %v479 = vadd.f32 %v478, 1.0
    %v480 = vrcp.pop %v479
    %v481 = vmul.f32 1.0, %v480
    %v482 = vtanh.pop %v475
    %v483 = vmul.f32 %v481, %v413
    %485 = vrot.lane.b32.xlu0 %v482, 32
    %v486 = vpop.permute.xlu0 %485
    %v488 = vmul.f32 %v481, %v486
    %490 = vrot.lane.b32.xlu0 %v488, 32
    %v491 = vpop.permute.xlu0 %490
    %v493 = vadd.f32 %v483, %v491
    %v494 = vtanh.pop %v493
    %496 = vrot.lane.b32.xlu0 %v494, 32
    %v497 = vpop.permute.xlu0 %496
    %v499 = vmul.f32 %v481, %v497
    %501 = vrot.lane.b32.xlu0 %v499, 64
    %v502 = vpop.permute.xlu0 %501
    %s504 = scalar_lea.vmem [#allocation3], 4
    %505 = vst.msk [vmem:[%s504] sm:$0x3] %vm344, %v502
    %s506 = scalar_lea.vmem [#allocation2], 6
    %v507 = vld [vmem:[%s506] sm:$0x3]
    %v508 = vpack.c.bf16 %v499, %v499
    %510 = vrot.lane.b32.xlu0 %v508, 64
    %v511 = vpop.permute.xlu0 %510
    %v513 = vsel %vm267, %v511, 0
    %515 = vmatprep.subr.bf16.mxu0 0
    %516 = vmatpush1.bf16.msra.mxu0 %v103
    %517 = vmatprep.subr.bf16.mxu0 0
    %518 = vmatpush1.bf16.msra.mxu0 %v104
    %519 = vmatprep.subr.bf16.mxu0 0
    %520 = vmatpush1.bf16.msra.mxu0 0
    %521 = vmatprep.subr.bf16.mxu0 0
    %522 = vmatpush1.bf16.msra.mxu0 0
    %523 = vmatprep.subr.bf16.mxu0 0
    %524 = vmatpush1.bf16.msra.mxu0 0
    %525 = vmatprep.subr.bf16.mxu0 0
    %526 = vmatpush1.bf16.msra.mxu0 0
    %527 = vmatprep.subr.bf16.mxu0 0
    %528 = vmatpush1.bf16.msra.mxu0 0
    %529 = vmatprep.subr.bf16.mxu0 0
    %530 = vmatpush1.bf16.msra.mxu0 0
    %531 = vmatprep.subr.bf16.mxu0 0
    %532 = vmatpush1.bf16.msra.mxu0 0
    %533 = vmatprep.subr.bf16.mxu0 0
    %534 = vmatpush1.bf16.msra.mxu0 0
    %535 = vmatprep.subr.bf16.mxu0 0
    %536 = vmatpush1.bf16.msra.mxu0 0
    %537 = vmatprep.subr.bf16.mxu0 0
    %538 = vmatpush1.bf16.msra.mxu0 0
    %539 = vmatprep.subr.bf16.mxu0 0
    %540 = vmatpush1.bf16.msra.mxu0 0
    %541 = vmatprep.subr.bf16.mxu0 0
    %542 = vmatpush1.bf16.msra.mxu0 0
    %543 = vmatprep.subr.bf16.mxu0 0
    %544 = vmatpush1.bf16.msra.mxu0 0
    %545 = vmatprep.subr.bf16.mxu0 0
    %546 = vmatpush1.bf16.msra.mxu0 0
    %547 = vmatprep.mubr.bf16.mxu0 0
    %548 = vmatmul.mubr.bf16.gmra.mrb[0].mxu0 %v513
    %v549 = vpop.f32.mrb[0].mxu0
    %v550 = vadd.f32 0.0, %v549
    %v551 = vpop.f32.mrb[0].mxu0
    %v552 = vpop.f32.mrb[0].mxu0
    %v553 = vpop.f32.mrb[0].mxu0
    %554 = vdwg.mxu0
    %v555 = vadd.f32 %v507, %v550
    %v556 = vxor.u32 %v555, 2147483648
    %v557 = vmul.f32 %v556, 1.442695
    %v558 = vpow.pop %v557
    %v559 = vadd.f32 %v558, 1.0
    %v560 = vrcp.pop %v559
    %v561 = vmul.f32 1.0, %v560
    %v562 = vtanh.pop %v555
    %v563 = vmul.f32 %v561, %v493
    %565 = vrot.lane.b32.xlu0 %v562, 32
    %v566 = vpop.permute.xlu0 %565
    %v568 = vmul.f32 %v561, %v566
    %570 = vrot.lane.b32.xlu0 %v568, 32
    %v571 = vpop.permute.xlu0 %570
    %v573 = vadd.f32 %v563, %v571
    %v574 = vtanh.pop %v573
    %576 = vrot.lane.b32.xlu0 %v574, 32
    %v577 = vpop.permute.xlu0 %576
    %v579 = vmul.f32 %v561, %v577
    %581 = vrot.lane.b32.xlu0 %v579, 64
    %v582 = vpop.permute.xlu0 %581
    %s584 = scalar_lea.vmem [#allocation3], 6
    %585 = vst.msk [vmem:[%s584] sm:$0x3] %vm344, %v582
    %s586 = scalar_lea.vmem [#allocation2], 8
    %v587 = vld [vmem:[%s586] sm:$0x3]
    %v588 = vpack.c.bf16 %v579, %v579
    %590 = vrot.lane.b32.xlu0 %v588, 64
    %v591 = vpop.permute.xlu0 %590
    %v593 = vsel %vm267, %v591, 0
    %595 = vmatprep.subr.bf16.mxu0 0
    %596 = vmatpush1.bf16.msra.mxu0 %v103
    %597 = vmatprep.subr.bf16.mxu0 0
    %598 = vmatpush1.bf16.msra.mxu0 %v104
    %599 = vmatprep.subr.bf16.mxu0 0
    %600 = vmatpush1.bf16.msra.mxu0 0
    %601 = vmatprep.subr.bf16.mxu0 0
    %602 = vmatpush1.bf16.msra.mxu0 0
    %603 = vmatprep.subr.bf16.mxu0 0
    %604 = vmatpush1.bf16.msra.mxu0 0
    %605 = vmatprep.subr.bf16.mxu0 0
    %606 = vmatpush1.bf16.msra.mxu0 0
    %607 = vmatprep.subr.bf16.mxu0 0
    %608 = vmatpush1.bf16.msra.mxu0 0
    %609 = vmatprep.subr.bf16.mxu0 0
    %610 = vmatpush1.bf16.msra.mxu0 0
    %611 = vmatprep.subr.bf16.mxu0 0
    %612 = vmatpush1.bf16.msra.mxu0 0
    %613 = vmatprep.subr.bf16.mxu0 0
    %614 = vmatpush1.bf16.msra.mxu0 0
    %615 = vmatprep.subr.bf16.mxu0 0
    %616 = vmatpush1.bf16.msra.mxu0 0
    %617 = vmatprep.subr.bf16.mxu0 0
    %618 = vmatpush1.bf16.msra.mxu0 0
    %619 = vmatprep.subr.bf16.mxu0 0
    %620 = vmatpush1.bf16.msra.mxu0 0
    %621 = vmatprep.subr.bf16.mxu0 0
    %622 = vmatpush1.bf16.msra.mxu0 0
    %623 = vmatprep.subr.bf16.mxu0 0
    %624 = vmatpush1.bf16.msra.mxu0 0
    %625 = vmatprep.subr.bf16.mxu0 0
    %626 = vmatpush1.bf16.msra.mxu0 0
    %627 = vmatprep.mubr.bf16.mxu0 0
    %628 = vmatmul.mubr.bf16.gmra.mrb[0].mxu0 %v593
    %v629 = vpop.f32.mrb[0].mxu0
    %v630 = vadd.f32 0.0, %v629
    %v631 = vpop.f32.mrb[0].mxu0
    %v632 = vpop.f32.mrb[0].mxu0
    %v633 = vpop.f32.mrb[0].mxu0
    %634 = vdwg.mxu0
    %v635 = vadd.f32 %v587, %v630
    %v636 = vxor.u32 %v635, 2147483648
    %v637 = vmul.f32 %v636, 1.442695
    %v638 = vpow.pop %v637
    %v639 = vadd.f32 %v638, 1.0
    %v640 = vrcp.pop %v639
    %v641 = vmul.f32 1.0, %v640
    %v642 = vtanh.pop %v635
    %v643 = vmul.f32 %v641, %v573
    %645 = vrot.lane.b32.xlu0 %v642, 32
    %v646 = vpop.permute.xlu0 %645
    %v648 = vmul.f32 %v641, %v646
    %650 = vrot.lane.b32.xlu0 %v648, 32
    %v651 = vpop.permute.xlu0 %650
    %v653 = vadd.f32 %v643, %v651
    %v654 = vtanh.pop %v653
    %656 = vrot.lane.b32.xlu0 %v654, 32
    %v657 = vpop.permute.xlu0 %656
    %v659 = vmul.f32 %v641, %v657
    %661 = vrot.lane.b32.xlu0 %v659, 64
    %v662 = vpop.permute.xlu0 %661
    %s664 = scalar_lea.vmem [#allocation3], 8
    %665 = vst.msk [vmem:[%s664] sm:$0x3] %vm344, %v662
    %s666 = scalar_lea.vmem [#allocation2], 10
    %v667 = vld [vmem:[%s666] sm:$0x3]
    %v668 = vpack.c.bf16 %v659, %v659
    %670 = vrot.lane.b32.xlu0 %v668, 64
    %v671 = vpop.permute.xlu0 %670
    %v673 = vsel %vm267, %v671, 0
    %675 = vmatprep.subr.bf16.mxu0 0
    %676 = vmatpush1.bf16.msra.mxu0 %v103
    %677 = vmatprep.subr.bf16.mxu0 0
    %678 = vmatpush1.bf16.msra.mxu0 %v104
    %679 = vmatprep.subr.bf16.mxu0 0
    %680 = vmatpush1.bf16.msra.mxu0 0
    %681 = vmatprep.subr.bf16.mxu0 0
    %682 = vmatpush1.bf16.msra.mxu0 0
    %683 = vmatprep.subr.bf16.mxu0 0
    %684 = vmatpush1.bf16.msra.mxu0 0
    %685 = vmatprep.subr.bf16.mxu0 0
    %686 = vmatpush1.bf16.msra.mxu0 0
    %687 = vmatprep.subr.bf16.mxu0 0
    %688 = vmatpush1.bf16.msra.mxu0 0
    %689 = vmatprep.subr.bf16.mxu0 0
    %690 = vmatpush1.bf16.msra.mxu0 0
    %691 = vmatprep.subr.bf16.mxu0 0
    %692 = vmatpush1.bf16.msra.mxu0 0
    %693 = vmatprep.subr.bf16.mxu0 0
    %694 = vmatpush1.bf16.msra.mxu0 0
    %695 = vmatprep.subr.bf16.mxu0 0
    %696 = vmatpush1.bf16.msra.mxu0 0
    %697 = vmatprep.subr.bf16.mxu0 0
    %698 = vmatpush1.bf16.msra.mxu0 0
    %699 = vmatprep.subr.bf16.mxu0 0
    %700 = vmatpush1.bf16.msra.mxu0 0
    %701 = vmatprep.subr.bf16.mxu0 0
    %702 = vmatpush1.bf16.msra.mxu0 0
    %703 = vmatprep.subr.bf16.mxu0 0
    %704 = vmatpush1.bf16.msra.mxu0 0
    %705 = vmatprep.subr.bf16.mxu0 0
    %706 = vmatpush1.bf16.msra.mxu0 0
    %707 = vmatprep.mubr.bf16.mxu0 0
    %708 = vmatmul.mubr.bf16.gmra.mrb[0].mxu0 %v673
    %v709 = vpop.f32.mrb[0].mxu0
    %v710 = vadd.f32 0.0, %v709
    %v711 = vpop.f32.mrb[0].mxu0
    %v712 = vpop.f32.mrb[0].mxu0
    %v713 = vpop.f32.mrb[0].mxu0
    %714 = vdwg.mxu0
    %v715 = vadd.f32 %v667, %v710
    %v716 = vxor.u32 %v715, 2147483648
    %v717 = vmul.f32 %v716, 1.442695
    %v718 = vpow.pop %v717
    %v719 = vadd.f32 %v718, 1.0
    %v720 = vrcp.pop %v719
    %v721 = vmul.f32 1.0, %v720
    %v722 = vtanh.pop %v715
    %v723 = vmul.f32 %v721, %v653
    %725 = vrot.lane.b32.xlu0 %v722, 32
    %v726 = vpop.permute.xlu0 %725
    %v728 = vmul.f32 %v721, %v726
    %730 = vrot.lane.b32.xlu0 %v728, 32
    %v731 = vpop.permute.xlu0 %730
    %v733 = vadd.f32 %v723, %v731
    %v734 = vtanh.pop %v733
    %736 = vrot.lane.b32.xlu0 %v734, 32
    %v737 = vpop.permute.xlu0 %736
    %v739 = vmul.f32 %v721, %v737
    %741 = vrot.lane.b32.xlu0 %v739, 64
    %v742 = vpop.permute.xlu0 %741
    %s744 = scalar_lea.vmem [#allocation3], 10
    %745 = vst.msk [vmem:[%s744] sm:$0x3] %vm344, %v742
    %s746 = scalar_lea.vmem [#allocation2], 12
    %v747 = vld [vmem:[%s746] sm:$0x3]
    %v748 = vpack.c.bf16 %v739, %v739
    %750 = vrot.lane.b32.xlu0 %v748, 64
    %v751 = vpop.permute.xlu0 %750
    %v753 = vsel %vm267, %v751, 0
    %755 = vmatprep.subr.bf16.mxu0 0
    %756 = vmatpush1.bf16.msra.mxu0 %v103
    %757 = vmatprep.subr.bf16.mxu0 0
    %758 = vmatpush1.bf16.msra.mxu0 %v104
    %759 = vmatprep.subr.bf16.mxu0 0
    %760 = vmatpush1.bf16.msra.mxu0 0
    %761 = vmatprep.subr.bf16.mxu0 0
    %762 = vmatpush1.bf16.msra.mxu0 0
    %763 = vmatprep.subr.bf16.mxu0 0
    %764 = vmatpush1.bf16.msra.mxu0 0
    %765 = vmatprep.subr.bf16.mxu0 0
    %766 = vmatpush1.bf16.msra.mxu0 0
    %767 = vmatprep.subr.bf16.mxu0 0
    %768 = vmatpush1.bf16.msra.mxu0 0
    %769 = vmatprep.subr.bf16.mxu0 0
    %770 = vmatpush1.bf16.msra.mxu0 0
    %771 = vmatprep.subr.bf16.mxu0 0
    %772 = vmatpush1.bf16.msra.mxu0 0
    %773 = vmatprep.subr.bf16.mxu0 0
    %774 = vmatpush1.bf16.msra.mxu0 0
    %775 = vmatprep.subr.bf16.mxu0 0
    %776 = vmatpush1.bf16.msra.mxu0 0
    %777 = vmatprep.subr.bf16.mxu0 0
    %778 = vmatpush1.bf16.msra.mxu0 0
    %779 = vmatprep.subr.bf16.mxu0 0
    %780 = vmatpush1.bf16.msra.mxu0 0
    %781 = vmatprep.subr.bf16.mxu0 0
    %782 = vmatpush1.bf16.msra.mxu0 0
    %783 = vmatprep.subr.bf16.mxu0 0
    %784 = vmatpush1.bf16.msra.mxu0 0
    %785 = vmatprep.subr.bf16.mxu0 0
    %786 = vmatpush1.bf16.msra.mxu0 0
    %787 = vmatprep.mubr.bf16.mxu0 0
    %788 = vmatmul.mubr.bf16.gmra.mrb[0].mxu0 %v753
    %v789 = vpop.f32.mrb[0].mxu0
    %v790 = vadd.f32 0.0, %v789
    %v791 = vpop.f32.mrb[0].mxu0
    %v792 = vpop.f32.mrb[0].mxu0
    %v793 = vpop.f32.mrb[0].mxu0
    %794 = vdwg.mxu0
    %v795 = vadd.f32 %v747, %v790
    %v796 = vxor.u32 %v795, 2147483648
    %v797 = vmul.f32 %v796, 1.442695
    %v798 = vpow.pop %v797
    %v799 = vadd.f32 %v798, 1.0
    %v800 = vrcp.pop %v799
    %v801 = vmul.f32 1.0, %v800
    %v802 = vtanh.pop %v795
    %v803 = vmul.f32 %v801, %v733
    %805 = vrot.lane.b32.xlu0 %v802, 32
    %v806 = vpop.permute.xlu0 %805
    %v808 = vmul.f32 %v801, %v806
    %810 = vrot.lane.b32.xlu0 %v808, 32
    %v811 = vpop.permute.xlu0 %810
    %v813 = vadd.f32 %v803, %v811
    %v814 = vtanh.pop %v813
    %816 = vrot.lane.b32.xlu0 %v814, 32
    %v817 = vpop.permute.xlu0 %816
    %v819 = vmul.f32 %v801, %v817
    %821 = vrot.lane.b32.xlu0 %v819, 64
    %v822 = vpop.permute.xlu0 %821
    %s824 = scalar_lea.vmem [#allocation3], 12
    %825 = vst.msk [vmem:[%s824] sm:$0x3] %vm344, %v822
    %s826 = scalar_lea.vmem [#allocation2], 14
    %v827 = vld [vmem:[%s826] sm:$0x3]
    %v828 = vpack.c.bf16 %v819, %v819
    %830 = vrot.lane.b32.xlu0 %v828, 64
    %v831 = vpop.permute.xlu0 %830
    %v833 = vsel %vm267, %v831, 0
    %835 = vmatprep.subr.bf16.mxu0 0
    %836 = vmatpush1.bf16.msra.mxu0 %v103
    %837 = vmatprep.subr.bf16.mxu0 0
    %838 = vmatpush1.bf16.msra.mxu0 %v104
    %839 = vmatprep.subr.bf16.mxu0 0
    %840 = vmatpush1.bf16.msra.mxu0 0
    %841 = vmatprep.subr.bf16.mxu0 0
    %842 = vmatpush1.bf16.msra.mxu0 0
    %843 = vmatprep.subr.bf16.mxu0 0
    %844 = vmatpush1.bf16.msra.mxu0 0
    %845 = vmatprep.subr.bf16.mxu0 0
    %846 = vmatpush1.bf16.msra.mxu0 0
    %847 = vmatprep.subr.bf16.mxu0 0
    %848 = vmatpush1.bf16.msra.mxu0 0
    %849 = vmatprep.subr.bf16.mxu0 0
    %850 = vmatpush1.bf16.msra.mxu0 0
    %851 = vmatprep.subr.bf16.mxu0 0
    %852 = vmatpush1.bf16.msra.mxu0 0
    %853 = vmatprep.subr.bf16.mxu0 0
    %854 = vmatpush1.bf16.msra.mxu0 0
    %855 = vmatprep.subr.bf16.mxu0 0
    %856 = vmatpush1.bf16.msra.mxu0 0
    %857 = vmatprep.subr.bf16.mxu0 0
    %858 = vmatpush1.bf16.msra.mxu0 0
    %859 = vmatprep.subr.bf16.mxu0 0
    %860 = vmatpush1.bf16.msra.mxu0 0
    %861 = vmatprep.subr.bf16.mxu0 0
    %862 = vmatpush1.bf16.msra.mxu0 0
    %863 = vmatprep.subr.bf16.mxu0 0
    %864 = vmatpush1.bf16.msra.mxu0 0
    %865 = vmatprep.subr.bf16.mxu0 0
    %866 = vmatpush1.bf16.msra.mxu0 0
    %867 = vmatprep.mubr.bf16.mxu0 0
    %868 = vmatmul.mubr.bf16.gmra.mrb[0].mxu0 %v833
    %v869 = vpop.f32.mrb[0].mxu0
    %v870 = vadd.f32 0.0, %v869
    %v871 = vpop.f32.mrb[0].mxu0
    %v872 = vpop.f32.mrb[0].mxu0
    %v873 = vpop.f32.mrb[0].mxu0
    %874 = vdwg.mxu0
    %v875 = vadd.f32 %v827, %v870
    %v876 = vxor.u32 %v875, 2147483648
    %v877 = vmul.f32 %v876, 1.442695
    %v878 = vpow.pop %v877
    %v879 = vadd.f32 %v878, 1.0
    %v880 = vrcp.pop %v879
    %v881 = vmul.f32 1.0, %v880
    %v882 = vtanh.pop %v875
    %v883 = vmul.f32 %v881, %v813
    %885 = vrot.lane.b32.xlu0 %v882, 32
    %v886 = vpop.permute.xlu0 %885
    %v888 = vmul.f32 %v881, %v886
    %890 = vrot.lane.b32.xlu0 %v888, 32
    %v891 = vpop.permute.xlu0 %890
    %v893 = vadd.f32 %v883, %v891
    %v894 = vtanh.pop %v893
    %896 = vrot.lane.b32.xlu0 %v894, 32
    %v897 = vpop.permute.xlu0 %896
    %v899 = vmul.f32 %v881, %v897
    %901 = vrot.lane.b32.xlu0 %v899, 64
    %v902 = vpop.permute.xlu0 %901
    %s904 = scalar_lea.vmem [#allocation3], 14
    %905 = vst.msk [vmem:[%s904] sm:$0x3] %vm344, %v902
    %906 = vst.msk [vmem:[#allocation12] sm:$0x3] %vm344, %v902
    %908 = vrot.lane.b32.xlu0 %v893, 96
    %v909 = vpop.permute.xlu0 %908
    %911 = vst.msk [vmem:[#allocation13] sm:$0x3] %vm344, %v909
    %v912 = vld [vmem:[%s6] sm:$0xff]
    %v913 = vld [vmem:[%s6 + $0x8] sm:$0xff]
    %v914 = vld [vmem:[%s6 + $0x10] sm:$0xff]
    %v915 = vld [vmem:[%s6 + $0x18] sm:$0xff]
    %v916 = vld [vmem:[%s7] sm:$0xff]
    %v917 = vld [vmem:[%s7 + $0x8] sm:$0xff]
    %v918 = vld [vmem:[%s7 + $0x10] sm:$0xff]
    %v919 = vld [vmem:[%s7 + $0x18] sm:$0xff]
    %v920 = vpack.c.bf16 %v917, %v916
    %v921 = vpack.c.bf16 %v919, %v918
    %v922 = vld [vmem:[%s8] sm:$0x1]
    %v923 = vld [vmem:[#allocation3] sm:$0x3]
    %v924 = vld [vmem:[#allocation3 + $0x2] sm:$0x3]
    %v925 = vld [vmem:[#allocation3 + $0x4] sm:$0x3]
    %v926 = vld [vmem:[#allocation3 + $0x6] sm:$0x3]
    %v927 = vld [vmem:[#allocation3 + $0x8] sm:$0x3]
    %v928 = vld [vmem:[#allocation3 + $0xa] sm:$0x3]
    %v929 = vld [vmem:[#allocation3 + $0xc] sm:$0x3]
    %v930 = vld [vmem:[#allocation3 + $0xe] sm:$0x3]
    %v939 = vcombine.low %v923, %v924
    %v940 = vcombine.low %v925, %v926
    %v942 = vunpack.c.l.s4 1983009808
    %v943 = vunpack.c.0.s8 %v942
    %v944 = vlaneseq
    %v945 = vshrl.u32 %v944, 7
    %v946 = vsub.s32 %v943, %v945
    %v947 = vrot.slane %v939, %v946
    %v949 = vunpack.c.l.s4 1983009808
    %v950 = vunpack.c.0.s8 %v949
    %v951 = vlaneseq
    %v952 = vshrl.u32 %v951, 7
    %v953 = vsub.s32 %v950, %v952
    %v954 = vrot.slane %v940, %v953
    %v955 = vcombine.low %v947, %v954
    %v956 = vcombine.low %v927, %v928
    %v957 = vcombine.low %v929, %v930
    %v959 = vunpack.c.l.s4 1983009808
    %v960 = vunpack.c.0.s8 %v959
    %v961 = vlaneseq
    %v962 = vshrl.u32 %v961, 7
    %v963 = vsub.s32 %v960, %v962
    %v964 = vrot.slane %v956, %v963
    %v966 = vunpack.c.l.s4 1983009808
    %v967 = vunpack.c.0.s8 %v966
    %v968 = vlaneseq
    %v969 = vshrl.u32 %v968, 7
    %v970 = vsub.s32 %v967, %v969
    %v971 = vrot.slane %v957, %v970
    %v972 = vcombine.low %v964, %v971
    %v975 = vpack.c.bf16 %v972, %v955
    %v976 = vpack.c.bf16 %v913, %v912
    %v977 = vpack.c.bf16 %v915, %v914
    %v979 = vlaneseq
    %v980 = vshrl.u32 %v979, 7
    %v981 = vsub.s32 0, %v980
    %v982 = vrot.slane %v922, %v981
    %v985 = vsel %vm267, %v975, 0
    %987 = vmatprep.subr.bf16.mxu0 0
    %988 = vmatpush1.bf16.msra.mxu0 %v976
    %989 = vmatprep.subr.bf16.mxu0 0
    %990 = vmatpush1.bf16.msra.mxu0 %v977
    %991 = vmatprep.subr.bf16.mxu0 0
    %992 = vmatpush1.bf16.msra.mxu0 0
    %993 = vmatprep.subr.bf16.mxu0 0
    %994 = vmatpush1.bf16.msra.mxu0 0
    %995 = vmatprep.subr.bf16.mxu0 0
    %996 = vmatpush1.bf16.msra.mxu0 0
    %997 = vmatprep.subr.bf16.mxu0 0
    %998 = vmatpush1.bf16.msra.mxu0 0
    %999 = vmatprep.subr.bf16.mxu0 0
    %1000 = vmatpush1.bf16.msra.mxu0 0
    %1001 = vmatprep.subr.bf16.mxu0 0
    %1002 = vmatpush1.bf16.msra.mxu0 0
    %1003 = vmatprep.subr.bf16.mxu0 0
    %1004 = vmatpush1.bf16.msra.mxu0 0
    %1005 = vmatprep.subr.bf16.mxu0 0
    %1006 = vmatpush1.bf16.msra.mxu0 0
    %1007 = vmatprep.subr.bf16.mxu0 0
    %1008 = vmatpush1.bf16.msra.mxu0 0
    %1009 = vmatprep.subr.bf16.mxu0 0
    %1010 = vmatpush1.bf16.msra.mxu0 0
    %1011 = vmatprep.subr.bf16.mxu0 0
    %1012 = vmatpush1.bf16.msra.mxu0 0
    %1013 = vmatprep.subr.bf16.mxu0 0
    %1014 = vmatpush1.bf16.msra.mxu0 0
    %1015 = vmatprep.subr.bf16.mxu0 0
    %1016 = vmatpush1.bf16.msra.mxu0 0
    %1017 = vmatprep.subr.bf16.mxu0 0
    %1018 = vmatpush1.bf16.msra.mxu0 0
    %1019 = vmatprep.mubr.bf16.mxu0 0
    %1020 = vmatmul.mubr.bf16.gmra.mrb[0].mxu0 %v985
    %v1021 = vpop.f32.mrb[0].mxu0
    %v1022 = vadd.f32 %v982, %v1021
    %v1023 = vpop.f32.mrb[0].mxu0
    %v1024 = vpop.f32.mrb[0].mxu0
    %v1025 = vadd.f32 %v982, %v1024
    %v1026 = vpop.f32.mrb[0].mxu0
    %1027 = vdwg.mxu0
    %v1030 = vcombine.high %v1022, %v1022
    %v1032 = vunpack.c.l.s4 1983009808
    %v1033 = vunpack.c.0.s8 %v1032
    %v1034 = vlaneseq
    %v1035 = vshrl.u32 %v1034, 7
    %v1036 = vsub.s32 %v1033, %v1035
    %v1037 = vrot.slane %v1022, %v1036
    %v1039 = vunpack.c.l.s4 1983009808
    %v1040 = vunpack.c.0.s8 %v1039
    %v1041 = vlaneseq
    %v1042 = vshrl.u32 %v1041, 7
    %v1043 = vsub.s32 %v1040, %v1042
    %v1044 = vrot.slane %v1030, %v1043
    %v1045 = vcombine.high %v1037, %v1037
    %v1046 = vcombine.high %v1044, %v1044
    %v1047 = vcombine.high %v1025, %v1025
    %v1049 = vunpack.c.l.s4 1983009808
    %v1050 = vunpack.c.0.s8 %v1049
    %v1051 = vlaneseq
    %v1052 = vshrl.u32 %v1051, 7
    %v1053 = vsub.s32 %v1050, %v1052
    %v1054 = vrot.slane %v1025, %v1053
    %v1056 = vunpack.c.l.s4 1983009808
    %v1057 = vunpack.c.0.s8 %v1056
    %v1058 = vlaneseq
    %v1059 = vshrl.u32 %v1058, 7
    %v1060 = vsub.s32 %v1057, %v1059
    %v1061 = vrot.slane %v1047, %v1060
    %v1062 = vcombine.high %v1054, %v1054
    %v1063 = vcombine.high %v1061, %v1061
    %1072 = vst [vmem:[#allocation2] sm:$0x3] %v1037
    %1073 = vst [vmem:[#allocation2 + $0x2] sm:$0x3] %v1045
    %1074 = vst [vmem:[#allocation2 + $0x4] sm:$0x3] %v1044
    %1075 = vst [vmem:[#allocation2 + $0x6] sm:$0x3] %v1046
    %1076 = vst [vmem:[#allocation2 + $0x8] sm:$0x3] %v1054
    %1077 = vst [vmem:[#allocation2 + $0xa] sm:$0x3] %v1062
    %1078 = vst [vmem:[#allocation2 + $0xc] sm:$0x3] %v1061
    %1079 = vst [vmem:[#allocation2 + $0xe] sm:$0x3] %v1063
    %s1080 = scalar_lea.vmem [#allocation4], 2
    %v1081 = vld [vmem:[%s1080] sm:$0x3]
    %s1082 = scalar_lea.vmem [#allocation7], 2
    %v1083 = vld [vmem:[%s1082] sm:$0x3]
    %v1084 = vld [vmem:[#allocation2] sm:$0x3]
    %v1085 = vpack.c.bf16 %v1081, %v1081
    %v1087 = vsel %vm267, %v1085, 0
    %1089 = vmatprep.subr.bf16.mxu0 0
    %1090 = vmatpush1.bf16.msra.mxu0 %v920
    %1091 = vmatprep.subr.bf16.mxu0 0
    %1092 = vmatpush1.bf16.msra.mxu0 %v921
    %1093 = vmatprep.subr.bf16.mxu0 0
    %1094 = vmatpush1.bf16.msra.mxu0 0
    %1095 = vmatprep.subr.bf16.mxu0 0
    %1096 = vmatpush1.bf16.msra.mxu0 0
    %1097 = vmatprep.subr.bf16.mxu0 0
    %1098 = vmatpush1.bf16.msra.mxu0 0
    %1099 = vmatprep.subr.bf16.mxu0 0
    %1100 = vmatpush1.bf16.msra.mxu0 0
    %1101 = vmatprep.subr.bf16.mxu0 0
    %1102 = vmatpush1.bf16.msra.mxu0 0
    %1103 = vmatprep.subr.bf16.mxu0 0
    %1104 = vmatpush1.bf16.msra.mxu0 0
    %1105 = vmatprep.subr.bf16.mxu0 0
    %1106 = vmatpush1.bf16.msra.mxu0 0
    %1107 = vmatprep.subr.bf16.mxu0 0
    %1108 = vmatpush1.bf16.msra.mxu0 0
    %1109 = vmatprep.subr.bf16.mxu0 0
    %1110 = vmatpush1.bf16.msra.mxu0 0
    %1111 = vmatprep.subr.bf16.mxu0 0
    %1112 = vmatpush1.bf16.msra.mxu0 0
    %1113 = vmatprep.subr.bf16.mxu0 0
    %1114 = vmatpush1.bf16.msra.mxu0 0
    %1115 = vmatprep.subr.bf16.mxu0 0
    %1116 = vmatpush1.bf16.msra.mxu0 0
    %1117 = vmatprep.subr.bf16.mxu0 0
    %1118 = vmatpush1.bf16.msra.mxu0 0
    %1119 = vmatprep.subr.bf16.mxu0 0
    %1120 = vmatpush1.bf16.msra.mxu0 0
    %1121 = vmatprep.mubr.bf16.mxu0 0
    %1122 = vmatmul.mubr.bf16.gmra.mrb[0].mxu0 %v1087
    %v1123 = vpop.f32.mrb[0].mxu0
    %v1124 = vadd.f32 0.0, %v1123
    %v1125 = vpop.f32.mrb[0].mxu0
    %v1126 = vpop.f32.mrb[0].mxu0
    %v1127 = vpop.f32.mrb[0].mxu0
    %1128 = vdwg.mxu0
    %v1129 = vadd.f32 %v1084, %v1124
    %v1130 = vxor.u32 %v1129, 2147483648
    %v1131 = vmul.f32 %v1130, 1.442695
    %v1132 = vpow.pop %v1131
    %v1133 = vadd.f32 %v1132, 1.0
    %v1134 = vrcp.pop %v1133
    %v1135 = vmul.f32 1.0, %v1134
    %v1136 = vtanh.pop %v1129
    %1138 = vrot.lane.b32.xlu0 %v1083, 32
    %v1139 = vpop.permute.xlu0 %1138
    %v1141 = vmul.f32 %v1135, %v1139
    %1143 = vrot.lane.b32.xlu0 %v1136, 32
    %v1144 = vpop.permute.xlu0 %1143
    %v1146 = vmul.f32 %v1135, %v1144
    %1148 = vrot.lane.b32.xlu0 %v1146, 32
    %v1149 = vpop.permute.xlu0 %1148
    %v1151 = vadd.f32 %v1141, %v1149
    %v1152 = vtanh.pop %v1151
    %1154 = vrot.lane.b32.xlu0 %v1152, 32
    %v1155 = vpop.permute.xlu0 %1154
    %v1157 = vmul.f32 %v1135, %v1155
    %1159 = vrot.lane.b32.xlu0 %v1157, 64
    %v1160 = vpop.permute.xlu0 %1159
    %1162 = vst.msk [vmem:[#allocation3] sm:$0x3] %vm344, %v1160
    %v1163 = vld [vmem:[%s346] sm:$0x3]
    %v1164 = vpack.c.bf16 %v1157, %v1157
    %1166 = vrot.lane.b32.xlu0 %v1164, 64
    %v1167 = vpop.permute.xlu0 %1166
    %v1169 = vsel %vm267, %v1167, 0
    %1171 = vmatprep.subr.bf16.mxu0 0
    %1172 = vmatpush1.bf16.msra.mxu0 %v920
    %1173 = vmatprep.subr.bf16.mxu0 0
    %1174 = vmatpush1.bf16.msra.mxu0 %v921
    %1175 = vmatprep.subr.bf16.mxu0 0
    %1176 = vmatpush1.bf16.msra.mxu0 0
    %1177 = vmatprep.subr.bf16.mxu0 0
    %1178 = vmatpush1.bf16.msra.mxu0 0
    %1179 = vmatprep.subr.bf16.mxu0 0
    %1180 = vmatpush1.bf16.msra.mxu0 0
    %1181 = vmatprep.subr.bf16.mxu0 0
    %1182 = vmatpush1.bf16.msra.mxu0 0
    %1183 = vmatprep.subr.bf16.mxu0 0
    %1184 = vmatpush1.bf16.msra.mxu0 0
    %1185 = vmatprep.subr.bf16.mxu0 0
    %1186 = vmatpush1.bf16.msra.mxu0 0
    %1187 = vmatprep.subr.bf16.mxu0 0
    %1188 = vmatpush1.bf16.msra.mxu0 0
    %1189 = vmatprep.subr.bf16.mxu0 0
    %1190 = vmatpush1.bf16.msra.mxu0 0
    %1191 = vmatprep.subr.bf16.mxu0 0
    %1192 = vmatpush1.bf16.msra.mxu0 0
    %1193 = vmatprep.subr.bf16.mxu0 0
    %1194 = vmatpush1.bf16.msra.mxu0 0
    %1195 = vmatprep.subr.bf16.mxu0 0
    %1196 = vmatpush1.bf16.msra.mxu0 0
    %1197 = vmatprep.subr.bf16.mxu0 0
    %1198 = vmatpush1.bf16.msra.mxu0 0
    %1199 = vmatprep.subr.bf16.mxu0 0
    %1200 = vmatpush1.bf16.msra.mxu0 0
    %1201 = vmatprep.subr.bf16.mxu0 0
    %1202 = vmatpush1.bf16.msra.mxu0 0
    %1203 = vmatprep.mubr.bf16.mxu0 0
    %1204 = vmatmul.mubr.bf16.gmra.mrb[0].mxu0 %v1169
    %v1205 = vpop.f32.mrb[0].mxu0
    %v1206 = vadd.f32 0.0, %v1205
    %v1207 = vpop.f32.mrb[0].mxu0
    %v1208 = vpop.f32.mrb[0].mxu0
    %v1209 = vpop.f32.mrb[0].mxu0
    %1210 = vdwg.mxu0
    %v1211 = vadd.f32 %v1163, %v1206
    %v1212 = vxor.u32 %v1211, 2147483648
    %v1213 = vmul.f32 %v1212, 1.442695
    %v1214 = vpow.pop %v1213
    %v1215 = vadd.f32 %v1214, 1.0
    %v1216 = vrcp.pop %v1215
    %v1217 = vmul.f32 1.0, %v1216
    %v1218 = vtanh.pop %v1211
    %v1219 = vmul.f32 %v1217, %v1151
    %1221 = vrot.lane.b32.xlu0 %v1218, 32
    %v1222 = vpop.permute.xlu0 %1221
    %v1224 = vmul.f32 %v1217, %v1222
    %1226 = vrot.lane.b32.xlu0 %v1224, 32
    %v1227 = vpop.permute.xlu0 %1226
    %v1229 = vadd.f32 %v1219, %v1227
    %v1230 = vtanh.pop %v1229
    %1232 = vrot.lane.b32.xlu0 %v1230, 32
    %v1233 = vpop.permute.xlu0 %1232
    %v1235 = vmul.f32 %v1217, %v1233
    %1237 = vrot.lane.b32.xlu0 %v1235, 64
    %v1238 = vpop.permute.xlu0 %1237
    %1240 = vst.msk [vmem:[%s424] sm:$0x3] %vm344, %v1238
    %v1241 = vld [vmem:[%s426] sm:$0x3]
    %v1242 = vpack.c.bf16 %v1235, %v1235
    %1244 = vrot.lane.b32.xlu0 %v1242, 64
    %v1245 = vpop.permute.xlu0 %1244
    %v1247 = vsel %vm267, %v1245, 0
    %1249 = vmatprep.subr.bf16.mxu0 0
    %1250 = vmatpush1.bf16.msra.mxu0 %v920
    %1251 = vmatprep.subr.bf16.mxu0 0
    %1252 = vmatpush1.bf16.msra.mxu0 %v921
    %1253 = vmatprep.subr.bf16.mxu0 0
    %1254 = vmatpush1.bf16.msra.mxu0 0
    %1255 = vmatprep.subr.bf16.mxu0 0
    %1256 = vmatpush1.bf16.msra.mxu0 0
    %1257 = vmatprep.subr.bf16.mxu0 0
    %1258 = vmatpush1.bf16.msra.mxu0 0
    %1259 = vmatprep.subr.bf16.mxu0 0
    %1260 = vmatpush1.bf16.msra.mxu0 0
    %1261 = vmatprep.subr.bf16.mxu0 0
    %1262 = vmatpush1.bf16.msra.mxu0 0
    %1263 = vmatprep.subr.bf16.mxu0 0
    %1264 = vmatpush1.bf16.msra.mxu0 0
    %1265 = vmatprep.subr.bf16.mxu0 0
    %1266 = vmatpush1.bf16.msra.mxu0 0
    %1267 = vmatprep.subr.bf16.mxu0 0
    %1268 = vmatpush1.bf16.msra.mxu0 0
    %1269 = vmatprep.subr.bf16.mxu0 0
    %1270 = vmatpush1.bf16.msra.mxu0 0
    %1271 = vmatprep.subr.bf16.mxu0 0
    %1272 = vmatpush1.bf16.msra.mxu0 0
    %1273 = vmatprep.subr.bf16.mxu0 0
    %1274 = vmatpush1.bf16.msra.mxu0 0
    %1275 = vmatprep.subr.bf16.mxu0 0
    %1276 = vmatpush1.bf16.msra.mxu0 0
    %1277 = vmatprep.subr.bf16.mxu0 0
    %1278 = vmatpush1.bf16.msra.mxu0 0
    %1279 = vmatprep.subr.bf16.mxu0 0
    %1280 = vmatpush1.bf16.msra.mxu0 0
    %1281 = vmatprep.mubr.bf16.mxu0 0
    %1282 = vmatmul.mubr.bf16.gmra.mrb[0].mxu0 %v1247
    %v1283 = vpop.f32.mrb[0].mxu0
    %v1284 = vadd.f32 0.0, %v1283
    %v1285 = vpop.f32.mrb[0].mxu0
    %v1286 = vpop.f32.mrb[0].mxu0
    %v1287 = vpop.f32.mrb[0].mxu0
    %1288 = vdwg.mxu0
    %v1289 = vadd.f32 %v1241, %v1284
    %v1290 = vxor.u32 %v1289, 2147483648
    %v1291 = vmul.f32 %v1290, 1.442695
    %v1292 = vpow.pop %v1291
    %v1293 = vadd.f32 %v1292, 1.0
    %v1294 = vrcp.pop %v1293
    %v1295 = vmul.f32 1.0, %v1294
    %v1296 = vtanh.pop %v1289
    %v1297 = vmul.f32 %v1295, %v1229
    %1299 = vrot.lane.b32.xlu0 %v1296, 32
    %v1300 = vpop.permute.xlu0 %1299
    %v1302 = vmul.f32 %v1295, %v1300
    %1304 = vrot.lane.b32.xlu0 %v1302, 32
    %v1305 = vpop.permute.xlu0 %1304
    %v1307 = vadd.f32 %v1297, %v1305
    %v1308 = vtanh.pop %v1307
    %1310 = vrot.lane.b32.xlu0 %v1308, 32
    %v1311 = vpop.permute.xlu0 %1310
    %v1313 = vmul.f32 %v1295, %v1311
    %1315 = vrot.lane.b32.xlu0 %v1313, 64
    %v1316 = vpop.permute.xlu0 %1315
    %1318 = vst.msk [vmem:[%s504] sm:$0x3] %vm344, %v1316
    %v1319 = vld [vmem:[%s506] sm:$0x3]
    %v1320 = vpack.c.bf16 %v1313, %v1313
    %1322 = vrot.lane.b32.xlu0 %v1320, 64
    %v1323 = vpop.permute.xlu0 %1322
    %v1325 = vsel %vm267, %v1323, 0
    %1327 = vmatprep.subr.bf16.mxu0 0
    %1328 = vmatpush1.bf16.msra.mxu0 %v920
    %1329 = vmatprep.subr.bf16.mxu0 0
    %1330 = vmatpush1.bf16.msra.mxu0 %v921
    %1331 = vmatprep.subr.bf16.mxu0 0
    %1332 = vmatpush1.bf16.msra.mxu0 0
    %1333 = vmatprep.subr.bf16.mxu0 0
    %1334 = vmatpush1.bf16.msra.mxu0 0
    %1335 = vmatprep.subr.bf16.mxu0 0
    %1336 = vmatpush1.bf16.msra.mxu0 0
    %1337 = vmatprep.subr.bf16.mxu0 0
    %1338 = vmatpush1.bf16.msra.mxu0 0
    %1339 = vmatprep.subr.bf16.mxu0 0
    %1340 = vmatpush1.bf16.msra.mxu0 0
    %1341 = vmatprep.subr.bf16.mxu0 0
    %1342 = vmatpush1.bf16.msra.mxu0 0
    %1343 = vmatprep.subr.bf16.mxu0 0
    %1344 = vmatpush1.bf16.msra.mxu0 0
    %1345 = vmatprep.subr.bf16.mxu0 0
    %1346 = vmatpush1.bf16.msra.mxu0 0
    %1347 = vmatprep.subr.bf16.mxu0 0
    %1348 = vmatpush1.bf16.msra.mxu0 0
    %1349 = vmatprep.subr.bf16.mxu0 0
    %1350 = vmatpush1.bf16.msra.mxu0 0
    %1351 = vmatprep.subr.bf16.mxu0 0
    %1352 = vmatpush1.bf16.msra.mxu0 0
    %1353 = vmatprep.subr.bf16.mxu0 0
    %1354 = vmatpush1.bf16.msra.mxu0 0
    %1355 = vmatprep.subr.bf16.mxu0 0
    %1356 = vmatpush1.bf16.msra.mxu0 0
    %1357 = vmatprep.subr.bf16.mxu0 0
    %1358 = vmatpush1.bf16.msra.mxu0 0
    %1359 = vmatprep.mubr.bf16.mxu0 0
    %1360 = vmatmul.mubr.bf16.gmra.mrb[0].mxu0 %v1325
    %v1361 = vpop.f32.mrb[0].mxu0
    %v1362 = vadd.f32 0.0, %v1361
    %v1363 = vpop.f32.mrb[0].mxu0
    %v1364 = vpop.f32.mrb[0].mxu0
    %v1365 = vpop.f32.mrb[0].mxu0
    %1366 = vdwg.mxu0
    %v1367 = vadd.f32 %v1319, %v1362
    %v1368 = vxor.u32 %v1367, 2147483648
    %v1369 = vmul.f32 %v1368, 1.442695
    %v1370 = vpow.pop %v1369
    %v1371 = vadd.f32 %v1370, 1.0
    %v1372 = vrcp.pop %v1371
    %v1373 = vmul.f32 1.0, %v1372
    %v1374 = vtanh.pop %v1367
    %v1375 = vmul.f32 %v1373, %v1307
    %1377 = vrot.lane.b32.xlu0 %v1374, 32
    %v1378 = vpop.permute.xlu0 %1377
    %v1380 = vmul.f32 %v1373, %v1378
    %1382 = vrot.lane.b32.xlu0 %v1380, 32
    %v1383 = vpop.permute.xlu0 %1382
    %v1385 = vadd.f32 %v1375, %v1383
    %v1386 = vtanh.pop %v1385
    %1388 = vrot.lane.b32.xlu0 %v1386, 32
    %v1389 = vpop.permute.xlu0 %1388
    %v1391 = vmul.f32 %v1373, %v1389
    %1393 = vrot.lane.b32.xlu0 %v1391, 64
    %v1394 = vpop.permute.xlu0 %1393
    %1396 = vst.msk [vmem:[%s584] sm:$0x3] %vm344, %v1394
    %v1397 = vld [vmem:[%s586] sm:$0x3]
    %v1398 = vpack.c.bf16 %v1391, %v1391
    %1400 = vrot.lane.b32.xlu0 %v1398, 64
    %v1401 = vpop.permute.xlu0 %1400
    %v1403 = vsel %vm267, %v1401, 0
    %1405 = vmatprep.subr.bf16.mxu0 0
    %1406 = vmatpush1.bf16.msra.mxu0 %v920
    %1407 = vmatprep.subr.bf16.mxu0 0
    %1408 = vmatpush1.bf16.msra.mxu0 %v921
    %1409 = vmatprep.subr.bf16.mxu0 0
    %1410 = vmatpush1.bf16.msra.mxu0 0
    %1411 = vmatprep.subr.bf16.mxu0 0
    %1412 = vmatpush1.bf16.msra.mxu0 0
    %1413 = vmatprep.subr.bf16.mxu0 0
    %1414 = vmatpush1.bf16.msra.mxu0 0
    %1415 = vmatprep.subr.bf16.mxu0 0
    %1416 = vmatpush1.bf16.msra.mxu0 0
    %1417 = vmatprep.subr.bf16.mxu0 0
    %1418 = vmatpush1.bf16.msra.mxu0 0
    %1419 = vmatprep.subr.bf16.mxu0 0
    %1420 = vmatpush1.bf16.msra.mxu0 0
    %1421 = vmatprep.subr.bf16.mxu0 0
    %1422 = vmatpush1.bf16.msra.mxu0 0
    %1423 = vmatprep.subr.bf16.mxu0 0
    %1424 = vmatpush1.bf16.msra.mxu0 0
    %1425 = vmatprep.subr.bf16.mxu0 0
    %1426 = vmatpush1.bf16.msra.mxu0 0
    %1427 = vmatprep.subr.bf16.mxu0 0
    %1428 = vmatpush1.bf16.msra.mxu0 0
    %1429 = vmatprep.subr.bf16.mxu0 0
    %1430 = vmatpush1.bf16.msra.mxu0 0
    %1431 = vmatprep.subr.bf16.mxu0 0
    %1432 = vmatpush1.bf16.msra.mxu0 0
    %1433 = vmatprep.subr.bf16.mxu0 0
    %1434 = vmatpush1.bf16.msra.mxu0 0
    %1435 = vmatprep.subr.bf16.mxu0 0
    %1436 = vmatpush1.bf16.msra.mxu0 0
    %1437 = vmatprep.mubr.bf16.mxu0 0
    %1438 = vmatmul.mubr.bf16.gmra.mrb[0].mxu0 %v1403
    %v1439 = vpop.f32.mrb[0].mxu0
    %v1440 = vadd.f32 0.0, %v1439
    %v1441 = vpop.f32.mrb[0].mxu0
    %v1442 = vpop.f32.mrb[0].mxu0
    %v1443 = vpop.f32.mrb[0].mxu0
    %1444 = vdwg.mxu0
    %v1445 = vadd.f32 %v1397, %v1440
    %v1446 = vxor.u32 %v1445, 2147483648
    %v1447 = vmul.f32 %v1446, 1.442695
    %v1448 = vpow.pop %v1447
    %v1449 = vadd.f32 %v1448, 1.0
    %v1450 = vrcp.pop %v1449
    %v1451 = vmul.f32 1.0, %v1450
    %v1452 = vtanh.pop %v1445
    %v1453 = vmul.f32 %v1451, %v1385
    %1455 = vrot.lane.b32.xlu0 %v1452, 32
    %v1456 = vpop.permute.xlu0 %1455
    %v1458 = vmul.f32 %v1451, %v1456
    %1460 = vrot.lane.b32.xlu0 %v1458, 32
    %v1461 = vpop.permute.xlu0 %1460
    %v1463 = vadd.f32 %v1453, %v1461
    %v1464 = vtanh.pop %v1463
    %1466 = vrot.lane.b32.xlu0 %v1464, 32
    %v1467 = vpop.permute.xlu0 %1466
    %v1469 = vmul.f32 %v1451, %v1467
    %1471 = vrot.lane.b32.xlu0 %v1469, 64
    %v1472 = vpop.permute.xlu0 %1471
    %1474 = vst.msk [vmem:[%s664] sm:$0x3] %vm344, %v1472
    %v1475 = vld [vmem:[%s666] sm:$0x3]
    %v1476 = vpack.c.bf16 %v1469, %v1469
    %1478 = vrot.lane.b32.xlu0 %v1476, 64
    %v1479 = vpop.permute.xlu0 %1478
    %v1481 = vsel %vm267, %v1479, 0
    %1483 = vmatprep.subr.bf16.mxu0 0
    %1484 = vmatpush1.bf16.msra.mxu0 %v920
    %1485 = vmatprep.subr.bf16.mxu0 0
    %1486 = vmatpush1.bf16.msra.mxu0 %v921
    %1487 = vmatprep.subr.bf16.mxu0 0
    %1488 = vmatpush1.bf16.msra.mxu0 0
    %1489 = vmatprep.subr.bf16.mxu0 0
    %1490 = vmatpush1.bf16.msra.mxu0 0
    %1491 = vmatprep.subr.bf16.mxu0 0
    %1492 = vmatpush1.bf16.msra.mxu0 0
    %1493 = vmatprep.subr.bf16.mxu0 0
    %1494 = vmatpush1.bf16.msra.mxu0 0
    %1495 = vmatprep.subr.bf16.mxu0 0
    %1496 = vmatpush1.bf16.msra.mxu0 0
    %1497 = vmatprep.subr.bf16.mxu0 0
    %1498 = vmatpush1.bf16.msra.mxu0 0
    %1499 = vmatprep.subr.bf16.mxu0 0
    %1500 = vmatpush1.bf16.msra.mxu0 0
    %1501 = vmatprep.subr.bf16.mxu0 0
    %1502 = vmatpush1.bf16.msra.mxu0 0
    %1503 = vmatprep.subr.bf16.mxu0 0
    %1504 = vmatpush1.bf16.msra.mxu0 0
    %1505 = vmatprep.subr.bf16.mxu0 0
    %1506 = vmatpush1.bf16.msra.mxu0 0
    %1507 = vmatprep.subr.bf16.mxu0 0
    %1508 = vmatpush1.bf16.msra.mxu0 0
    %1509 = vmatprep.subr.bf16.mxu0 0
    %1510 = vmatpush1.bf16.msra.mxu0 0
    %1511 = vmatprep.subr.bf16.mxu0 0
    %1512 = vmatpush1.bf16.msra.mxu0 0
    %1513 = vmatprep.subr.bf16.mxu0 0
    %1514 = vmatpush1.bf16.msra.mxu0 0
    %1515 = vmatprep.mubr.bf16.mxu0 0
    %1516 = vmatmul.mubr.bf16.gmra.mrb[0].mxu0 %v1481
    %v1517 = vpop.f32.mrb[0].mxu0
    %v1518 = vadd.f32 0.0, %v1517
    %v1519 = vpop.f32.mrb[0].mxu0
    %v1520 = vpop.f32.mrb[0].mxu0
    %v1521 = vpop.f32.mrb[0].mxu0
    %1522 = vdwg.mxu0
    %v1523 = vadd.f32 %v1475, %v1518
    %v1524 = vxor.u32 %v1523, 2147483648
    %v1525 = vmul.f32 %v1524, 1.442695
    %v1526 = vpow.pop %v1525
    %v1527 = vadd.f32 %v1526, 1.0
    %v1528 = vrcp.pop %v1527
    %v1529 = vmul.f32 1.0, %v1528
    %v1530 = vtanh.pop %v1523
    %v1531 = vmul.f32 %v1529, %v1463
    %1533 = vrot.lane.b32.xlu0 %v1530, 32
    %v1534 = vpop.permute.xlu0 %1533
    %v1536 = vmul.f32 %v1529, %v1534
    %1538 = vrot.lane.b32.xlu0 %v1536, 32
    %v1539 = vpop.permute.xlu0 %1538
    %v1541 = vadd.f32 %v1531, %v1539
    %v1542 = vtanh.pop %v1541
    %1544 = vrot.lane.b32.xlu0 %v1542, 32
    %v1545 = vpop.permute.xlu0 %1544
    %v1547 = vmul.f32 %v1529, %v1545
    %1549 = vrot.lane.b32.xlu0 %v1547, 64
    %v1550 = vpop.permute.xlu0 %1549
    %1552 = vst.msk [vmem:[%s744] sm:$0x3] %vm344, %v1550
    %v1553 = vld [vmem:[%s746] sm:$0x3]
    %v1554 = vpack.c.bf16 %v1547, %v1547
    %1556 = vrot.lane.b32.xlu0 %v1554, 64
    %v1557 = vpop.permute.xlu0 %1556
    %v1559 = vsel %vm267, %v1557, 0
    %1561 = vmatprep.subr.bf16.mxu0 0
    %1562 = vmatpush1.bf16.msra.mxu0 %v920
    %1563 = vmatprep.subr.bf16.mxu0 0
    %1564 = vmatpush1.bf16.msra.mxu0 %v921
    %1565 = vmatprep.subr.bf16.mxu0 0
    %1566 = vmatpush1.bf16.msra.mxu0 0
    %1567 = vmatprep.subr.bf16.mxu0 0
    %1568 = vmatpush1.bf16.msra.mxu0 0
    %1569 = vmatprep.subr.bf16.mxu0 0
    %1570 = vmatpush1.bf16.msra.mxu0 0
    %1571 = vmatprep.subr.bf16.mxu0 0
    %1572 = vmatpush1.bf16.msra.mxu0 0
    %1573 = vmatprep.subr.bf16.mxu0 0
    %1574 = vmatpush1.bf16.msra.mxu0 0
    %1575 = vmatprep.subr.bf16.mxu0 0
    %1576 = vmatpush1.bf16.msra.mxu0 0
    %1577 = vmatprep.subr.bf16.mxu0 0
    %1578 = vmatpush1.bf16.msra.mxu0 0
    %1579 = vmatprep.subr.bf16.mxu0 0
    %1580 = vmatpush1.bf16.msra.mxu0 0
    %1581 = vmatprep.subr.bf16.mxu0 0
    %1582 = vmatpush1.bf16.msra.mxu0 0
    %1583 = vmatprep.subr.bf16.mxu0 0
    %1584 = vmatpush1.bf16.msra.mxu0 0
    %1585 = vmatprep.subr.bf16.mxu0 0
    %1586 = vmatpush1.bf16.msra.mxu0 0
    %1587 = vmatprep.subr.bf16.mxu0 0
    %1588 = vmatpush1.bf16.msra.mxu0 0
    %1589 = vmatprep.subr.bf16.mxu0 0
    %1590 = vmatpush1.bf16.msra.mxu0 0
    %1591 = vmatprep.subr.bf16.mxu0 0
    %1592 = vmatpush1.bf16.msra.mxu0 0
    %1593 = vmatprep.mubr.bf16.mxu0 0
    %1594 = vmatmul.mubr.bf16.gmra.mrb[0].mxu0 %v1559
    %v1595 = vpop.f32.mrb[0].mxu0
    %v1596 = vadd.f32 0.0, %v1595
    %v1597 = vpop.f32.mrb[0].mxu0
    %v1598 = vpop.f32.mrb[0].mxu0
    %v1599 = vpop.f32.mrb[0].mxu0
    %1600 = vdwg.mxu0
    %v1601 = vadd.f32 %v1553, %v1596
    %v1602 = vxor.u32 %v1601, 2147483648
    %v1603 = vmul.f32 %v1602, 1.442695
    %v1604 = vpow.pop %v1603
    %v1605 = vadd.f32 %v1604, 1.0
    %v1606 = vrcp.pop %v1605
    %v1607 = vmul.f32 1.0, %v1606
    %v1608 = vtanh.pop %v1601
    %v1609 = vmul.f32 %v1607, %v1541
    %1611 = vrot.lane.b32.xlu0 %v1608, 32
    %v1612 = vpop.permute.xlu0 %1611
    %v1614 = vmul.f32 %v1607, %v1612
    %1616 = vrot.lane.b32.xlu0 %v1614, 32
    %v1617 = vpop.permute.xlu0 %1616
    %v1619 = vadd.f32 %v1609, %v1617
    %v1620 = vtanh.pop %v1619
    %1622 = vrot.lane.b32.xlu0 %v1620, 32
    %v1623 = vpop.permute.xlu0 %1622
    %v1625 = vmul.f32 %v1607, %v1623
    %1627 = vrot.lane.b32.xlu0 %v1625, 64
    %v1628 = vpop.permute.xlu0 %1627
    %1630 = vst.msk [vmem:[%s824] sm:$0x3] %vm344, %v1628
    %v1631 = vld [vmem:[%s826] sm:$0x3]
    %v1632 = vpack.c.bf16 %v1625, %v1625
    %1634 = vrot.lane.b32.xlu0 %v1632, 64
    %v1635 = vpop.permute.xlu0 %1634
    %v1637 = vsel %vm267, %v1635, 0
    %1639 = vmatprep.subr.bf16.mxu0 0
    %1640 = vmatpush1.bf16.msra.mxu0 %v920
    %1641 = vmatprep.subr.bf16.mxu0 0
    %1642 = vmatpush1.bf16.msra.mxu0 %v921
    %1643 = vmatprep.subr.bf16.mxu0 0
    %1644 = vmatpush1.bf16.msra.mxu0 0
    %1645 = vmatprep.subr.bf16.mxu0 0
    %1646 = vmatpush1.bf16.msra.mxu0 0
    %1647 = vmatprep.subr.bf16.mxu0 0
    %1648 = vmatpush1.bf16.msra.mxu0 0
    %1649 = vmatprep.subr.bf16.mxu0 0
    %1650 = vmatpush1.bf16.msra.mxu0 0
    %1651 = vmatprep.subr.bf16.mxu0 0
    %1652 = vmatpush1.bf16.msra.mxu0 0
    %1653 = vmatprep.subr.bf16.mxu0 0
    %1654 = vmatpush1.bf16.msra.mxu0 0
    %1655 = vmatprep.subr.bf16.mxu0 0
    %1656 = vmatpush1.bf16.msra.mxu0 0
    %1657 = vmatprep.subr.bf16.mxu0 0
    %1658 = vmatpush1.bf16.msra.mxu0 0
    %1659 = vmatprep.subr.bf16.mxu0 0
    %1660 = vmatpush1.bf16.msra.mxu0 0
    %1661 = vmatprep.subr.bf16.mxu0 0
    %1662 = vmatpush1.bf16.msra.mxu0 0
    %1663 = vmatprep.subr.bf16.mxu0 0
    %1664 = vmatpush1.bf16.msra.mxu0 0
    %1665 = vmatprep.subr.bf16.mxu0 0
    %1666 = vmatpush1.bf16.msra.mxu0 0
    %1667 = vmatprep.subr.bf16.mxu0 0
    %1668 = vmatpush1.bf16.msra.mxu0 0
    %1669 = vmatprep.subr.bf16.mxu0 0
    %1670 = vmatpush1.bf16.msra.mxu0 0
    %1671 = vmatprep.mubr.bf16.mxu0 0
    %1672 = vmatmul.mubr.bf16.gmra.mrb[0].mxu0 %v1637
    %v1673 = vpop.f32.mrb[0].mxu0
    %v1674 = vadd.f32 0.0, %v1673
    %v1675 = vpop.f32.mrb[0].mxu0
    %v1676 = vpop.f32.mrb[0].mxu0
    %v1677 = vpop.f32.mrb[0].mxu0
    %1678 = vdwg.mxu0
    %v1679 = vadd.f32 %v1631, %v1674
    %v1680 = vxor.u32 %v1679, 2147483648
    %v1681 = vmul.f32 %v1680, 1.442695
    %v1682 = vpow.pop %v1681
    %v1683 = vadd.f32 %v1682, 1.0
    %v1684 = vrcp.pop %v1683
    %v1685 = vmul.f32 1.0, %v1684
    %v1686 = vtanh.pop %v1679
    %v1687 = vmul.f32 %v1685, %v1619
    %1689 = vrot.lane.b32.xlu0 %v1686, 32
    %v1690 = vpop.permute.xlu0 %1689
    %v1692 = vmul.f32 %v1685, %v1690
    %1694 = vrot.lane.b32.xlu0 %v1692, 32
    %v1695 = vpop.permute.xlu0 %1694
    %v1697 = vadd.f32 %v1687, %v1695
    %v1698 = vtanh.pop %v1697
    %1700 = vrot.lane.b32.xlu0 %v1698, 32
    %v1701 = vpop.permute.xlu0 %1700
    %v1703 = vmul.f32 %v1685, %v1701
    %1705 = vrot.lane.b32.xlu0 %v1703, 64
    %v1706 = vpop.permute.xlu0 %1705
    %1708 = vst.msk [vmem:[%s904] sm:$0x3] %vm344, %v1706
    %s1709 = scalar_lea.vmem [#allocation12], 2
    %1710 = vst.msk [vmem:[%s1709] sm:$0x3] %vm344, %v1706
    %1712 = vrot.lane.b32.xlu0 %v1697, 96
    %v1713 = vpop.permute.xlu0 %1712
    %s1715 = scalar_lea.vmem [#allocation13], 2
    %1716 = vst.msk [vmem:[%s1715] sm:$0x3] %vm344, %v1713
    %v1717 = vld [vmem:[#allocation3] sm:$0x3]
    %v1718 = vld [vmem:[#allocation3 + $0x2] sm:$0x3]
    %v1719 = vld [vmem:[#allocation3 + $0x4] sm:$0x3]
    %v1720 = vld [vmem:[#allocation3 + $0x6] sm:$0x3]
    %v1721 = vld [vmem:[#allocation3 + $0x8] sm:$0x3]
    %v1722 = vld [vmem:[#allocation3 + $0xa] sm:$0x3]
    %v1723 = vld [vmem:[#allocation3 + $0xc] sm:$0x3]
    %v1724 = vld [vmem:[#allocation3 + $0xe] sm:$0x3]
    %v1733 = vcombine.low %v1717, %v1718
    %v1734 = vcombine.low %v1719, %v1720
    %v1736 = vunpack.c.l.s4 1983009808
    %v1737 = vunpack.c.0.s8 %v1736
    %v1738 = vlaneseq
    %v1739 = vshrl.u32 %v1738, 7
    %v1740 = vsub.s32 %v1737, %v1739
    %v1741 = vrot.slane %v1733, %v1740
    %v1743 = vunpack.c.l.s4 1983009808
    %v1744 = vunpack.c.0.s8 %v1743
    %v1745 = vlaneseq
    %v1746 = vshrl.u32 %v1745, 7
    %v1747 = vsub.s32 %v1744, %v1746
    %v1748 = vrot.slane %v1734, %v1747
    %v1749 = vcombine.low %v1741, %v1748
    %v1750 = vcombine.low %v1721, %v1722
    %v1751 = vcombine.low %v1723, %v1724
    %v1753 = vunpack.c.l.s4 1983009808
    %v1754 = vunpack.c.0.s8 %v1753
    %v1755 = vlaneseq
    %v1756 = vshrl.u32 %v1755, 7
    %v1757 = vsub.s32 %v1754, %v1756
    %v1758 = vrot.slane %v1750, %v1757
    %v1760 = vunpack.c.l.s4 1983009808
    %v1761 = vunpack.c.0.s8 %v1760
    %v1762 = vlaneseq
    %v1763 = vshrl.u32 %v1762, 7
    %v1764 = vsub.s32 %v1761, %v1763
    %v1765 = vrot.slane %v1751, %v1764
    %v1766 = vcombine.low %v1758, %v1765
    %v1769 = vpack.c.bf16 %v1766, %v1749
    %v1770 = vld [vmem:[%s9] sm:$0xff]
    %v1771 = vld [vmem:[%s9 + $0x8] sm:$0xff]
    %v1772 = vld [vmem:[%s9 + $0x10] sm:$0xff]
    %v1773 = vld [vmem:[%s9 + $0x18] sm:$0xff]
    %v1774 = vpack.c.bf16 %v1771, %v1770
    %v1775 = vpack.c.bf16 %v1773, %v1772
    %v1776 = vld [vmem:[#allocation10] sm:$0x1]
    %v1778 = vlaneseq
    %v1779 = vshrl.u32 %v1778, 7
    %v1780 = vsub.s32 0, %v1779
    %v1781 = vrot.slane %v1776, %v1780
    %v1784 = vsel %vm267, %v1769, 0
    %1786 = vmatprep.subr.bf16.mxu0 0
    %1787 = vmatpush1.bf16.msra.mxu0 %v1774
    %1788 = vmatprep.subr.bf16.mxu0 0
    %1789 = vmatpush1.bf16.msra.mxu0 %v1775
    %1790 = vmatprep.subr.bf16.mxu0 0
    %1791 = vmatpush1.bf16.msra.mxu0 0
    %1792 = vmatprep.subr.bf16.mxu0 0
    %1793 = vmatpush1.bf16.msra.mxu0 0
    %1794 = vmatprep.subr.bf16.mxu0 0
    %1795 = vmatpush1.bf16.msra.mxu0 0
    %1796 = vmatprep.subr.bf16.mxu0 0
    %1797 = vmatpush1.bf16.msra.mxu0 0
    %1798 = vmatprep.subr.bf16.mxu0 0
    %1799 = vmatpush1.bf16.msra.mxu0 0
    %1800 = vmatprep.subr.bf16.mxu0 0
    %1801 = vmatpush1.bf16.msra.mxu0 0
    %1802 = vmatprep.subr.bf16.mxu0 0
    %1803 = vmatpush1.bf16.msra.mxu0 0
    %1804 = vmatprep.subr.bf16.mxu0 0
    %1805 = vmatpush1.bf16.msra.mxu0 0
    %1806 = vmatprep.subr.bf16.mxu0 0
    %1807 = vmatpush1.bf16.msra.mxu0 0
    %1808 = vmatprep.subr.bf16.mxu0 0
    %1809 = vmatpush1.bf16.msra.mxu0 0
    %1810 = vmatprep.subr.bf16.mxu0 0
    %1811 = vmatpush1.bf16.msra.mxu0 0
    %1812 = vmatprep.subr.bf16.mxu0 0
    %1813 = vmatpush1.bf16.msra.mxu0 0
    %1814 = vmatprep.subr.bf16.mxu0 0
    %1815 = vmatpush1.bf16.msra.mxu0 0
    %1816 = vmatprep.subr.bf16.mxu0 0
    %1817 = vmatpush1.bf16.msra.mxu0 0
    %1818 = vmatprep.mubr.bf16.mxu0 0
    %1819 = vmatmul.mubr.bf16.gmra.mrb[0].mxu0 %v1784
    %v1820 = vpop.f32.mrb[0].mxu0
    %v1821 = vadd.f32 %v1781, %v1820
    %v1822 = vpop.f32.mrb[0].mxu0
    %v1823 = vpop.f32.mrb[0].mxu0
    %v1824 = vadd.f32 %v1781, %v1823
    %v1825 = vpop.f32.mrb[0].mxu0
    %1826 = vdwg.mxu0
    %v1829 = vcombine.high %v1821, %v1821
    %v1831 = vunpack.c.l.s4 1983009808
    %v1832 = vunpack.c.0.s8 %v1831
    %v1833 = vlaneseq
    %v1834 = vshrl.u32 %v1833, 7
    %v1835 = vsub.s32 %v1832, %v1834
    %v1836 = vrot.slane %v1821, %v1835
    %v1838 = vunpack.c.l.s4 1983009808
    %v1839 = vunpack.c.0.s8 %v1838
    %v1840 = vlaneseq
    %v1841 = vshrl.u32 %v1840, 7
    %v1842 = vsub.s32 %v1839, %v1841
    %v1843 = vrot.slane %v1829, %v1842
    %v1844 = vcombine.high %v1836, %v1836
    %v1845 = vcombine.high %v1843, %v1843
    %v1846 = vcombine.high %v1824, %v1824
    %v1848 = vunpack.c.l.s4 1983009808
    %v1849 = vunpack.c.0.s8 %v1848
    %v1850 = vlaneseq
    %v1851 = vshrl.u32 %v1850, 7
    %v1852 = vsub.s32 %v1849, %v1851
    %v1853 = vrot.slane %v1824, %v1852
    %v1855 = vunpack.c.l.s4 1983009808
    %v1856 = vunpack.c.0.s8 %v1855
    %v1857 = vlaneseq
    %v1858 = vshrl.u32 %v1857, 7
    %v1859 = vsub.s32 %v1856, %v1858
    %v1860 = vrot.slane %v1846, %v1859
    %v1861 = vcombine.high %v1853, %v1853
    %v1862 = vcombine.high %v1860, %v1860
    %vm1871 = vcmask 25600
    %1872 = vst.msk [vmem:[%s11] sm:$0x3] %vm1871, %v1836
    %1873 = vst.msk [vmem:[%s11 + $0x2] sm:$0x3] %vm1871, %v1844
    %1874 = vst.msk [vmem:[%s11 + $0x4] sm:$0x3] %vm1871, %v1843
    %1875 = vst.msk [vmem:[%s11 + $0x6] sm:$0x3] %vm1871, %v1845
    %1876 = vst.msk [vmem:[%s11 + $0x8] sm:$0x3] %vm1871, %v1853
    %1877 = vst.msk [vmem:[%s11 + $0xa] sm:$0x3] %vm1871, %v1861
    %1878 = vst.msk [vmem:[%s11 + $0xc] sm:$0x3] %vm1871, %v1860
    %1879 = vst.msk [vmem:[%s11 + $0xe] sm:$0x3] %vm1871, %v1862
    // Predicated region
    $region62: #{rnn_forward.1} parent=1 // pred_check
      _
    $region63: #{rnn_forward.1} parent=1 // pred_check_branch
      %1881 = sbr.rel (0) target = $region65
    $region64: #{rnn_forward.1} parent=1 // pred_region
      _
    $region65: #{rnn_forward.1} parent=1 // pred_fallthru
      _
    // Predicated region
    $region66: #{rnn_forward.1} parent=1 // pred_check
      _
    $region67: #{rnn_forward.1} parent=1 // pred_check_branch
      %1883 = sbr.rel (0) target = $region69
    $region68: #{rnn_forward.1} parent=1 // pred_region
      %s1885 = ssub.s32 64, 64
      %1886 = vsyncadd [#allocation6], %s1885
      %s1887 = sshll.u32 [#allocation12], 4
      %s1888 = int_to_ptr.vmem [resolvable:$true] %s1887
      %1893 = dma.vmem_to_hbm [thread:$0]  %s1888, 64, %s12, [#allocation6], 32, 32, 2
    $region69: #{rnn_forward.1} parent=1 // pred_fallthru
      _
    // Predicated region
    $region70: #{rnn_forward.1} parent=1 // pred_check
      _
    $region71: #{rnn_forward.1} parent=1 // pred_check_branch
      %1895 = sbr.rel (0) target = $region73
    $region72: #{rnn_forward.1} parent=1 // pred_region
      %s1897 = ssub.s32 64, 64
      %1898 = vsyncadd [#allocation14], %s1897
      %s1899 = sshll.u32 [#allocation13], 4
      %s1900 = int_to_ptr.vmem [resolvable:$true] %s1899
      %1905 = dma.vmem_to_hbm [thread:$0]  %s1900, 64, %s13, [#allocation14], 32, 32, 2
    $region73: #{rnn_forward.1} parent=1 // pred_fallthru
      _
    // Predicated region
    $region74: #{rnn_forward.1} parent=1 // pred_check
      _
    $region75: #{rnn_forward.1} parent=1 // pred_check_branch
      %1907 = sbr.rel (0) target = $region77
    $region76: #{rnn_forward.1} parent=1 // pred_region
      _
    $region77: #{rnn_forward.1} parent=1 // pred_fallthru
      _
    // Predicated region
    $region78: #{rnn_forward.1} parent=1 // pred_check
      _
    $region79: #{rnn_forward.1} parent=1 // pred_check_branch
      %1909 = sbr.rel (0) target = $region81
    $region80: #{rnn_forward.1} parent=1 // pred_region
      %1910 = dma.done [#allocation6], 64
    $region81: #{rnn_forward.1} parent=1 // pred_fallthru
      _
    // Predicated region
    $region82: #{rnn_forward.1} parent=1 // pred_check
      _
    $region83: #{rnn_forward.1} parent=1 // pred_check_branch
      %1912 = sbr.rel (0) target = $region85
    $region84: #{rnn_forward.1} parent=1 // pred_region
      %1913 = dma.done [#allocation14], 64
    $region85: #{rnn_forward.1} parent=1 // pred_fallthru
      _
    %1914 = vsyncpa [#allocation5], 1
    %1915 = vsyncpa [#allocation8], 1
    %1916 = vsyncpa [#allocation11], 1
    %1917 = vsyncpa [#allocation6], 1
    %1918 = vsyncpa [#allocation14], 1

</llo_original>
